<compile_context>
chip_gen: v7x
topology: tpu7x:2x2x1
jax: 0.10.0
libtpu: 0.0.40
codegen_flags: <defaults>
</compile_context>

<pallas_src>
import functools

import jax
import jax.numpy as jnp
from jax import lax
from jax.experimental import pallas as pl
from jax.experimental.pallas import tpu as pltpu  # noqa: F401 (kept per convention)


def decoder_layer_kernel(x_ref, mask_ref, p_ref, o_ref, *, seq_len, num_heads):
    """Full norm-first transformer decoder layer on the flattened (B*S, E) batch."""
    x = x_ref[...]                       # (B*S, E) f32
    BS, E = x.shape
    H = num_heads
    Dh = E // H
    eps = 1e-5
    del seq_len  # batch structure is carried by the precomputed mask

    # ---- packed-parameter row offsets (static) ----
    R_SA_QKV, R_SA_OUT, R_CA_Q, R_CA_KV, R_CA_OUT, R_FF1, R_FF2, R_VEC = (
        0, E, 2 * E, 3 * E, 4 * E, 5 * E, 6 * E, 10 * E)

    def vec(i, width):                   # (1, width) row of the slab
        return p_ref[R_VEC + i:R_VEC + i + 1, 0:width]

    ln1_w, ln1_b = vec(0, E), vec(1, E)
    ln2_w, ln2_b = vec(2, E), vec(3, E)
    ln3_w, ln3_b = vec(4, E), vec(5, E)
    sa_in_b = vec(6, 3 * E)              # scale already folded into the Q part
    sa_out_b = vec(7, E)
    ca_in_b = vec(8, 3 * E)              # [q*scale | k | v] biases
    ca_out_b = vec(9, E)
    ff1_b = vec(10, 4 * E)
    ff2_b = vec(11, E)

    sa_qkv_t = p_ref[R_SA_QKV:R_SA_QKV + E, 0:3 * E]   # (E, 3E), scale folded into Q cols
    sa_out_t = p_ref[R_SA_OUT:R_SA_OUT + E, 0:E]       # (E, E)
    ca_q_t = p_ref[R_CA_Q:R_CA_Q + E, 0:E]             # (E, E), scale folded
    ca_kv_t = p_ref[R_CA_KV:R_CA_KV + E, 0:2 * E]      # (E, 2E)
    ca_out_t = p_ref[R_CA_OUT:R_CA_OUT + E, 0:E]       # (E, E)
    ff1_t = p_ref[R_FF1:R_FF1 + E, 0:4 * E]            # (E, 4E)
    ff2_t = p_ref[R_FF2:R_FF2 + 4 * E, 0:E]            # (4E, E)

    neg_mask = mask_ref[...]             # (BS, BS), 0 within a batch, -1e30 across

    def layer_norm(v, w, b):
        mu = jnp.mean(v, axis=-1, keepdims=True)
        c = v - mu
        var = jnp.mean(c * c, axis=-1, keepdims=True)
        return c * lax.rsqrt(var + eps) * w + b

    def mm(a, b):
        return jnp.dot(a, b, preferred_element_type=jnp.float32)

    def attend(q, k, v):
        # q is pre-scaled (scale folded into the projection weights/bias).
        head_outs = []
        for h in range(H):               # static unroll, H = 2
            sl = slice(h * Dh, (h + 1) * Dh)
            s = lax.dot_general(q[:, sl], k[:, sl], (((1,), (1,)), ((), ())),
                                preferred_element_type=jnp.float32)
            s = s + neg_mask
            s = s - jnp.max(s, axis=-1, keepdims=True)
            p = jnp.exp(s)
            p = p * pl.reciprocal(jnp.sum(p, axis=-1, keepdims=True), approx=True)
            head_outs.append(mm(p, v[:, sl]))
        return jnp.concatenate(head_outs, axis=-1)     # (BS, E)

    # norm_first decoder layer:
    #   x = x + self_attn(norm1(x))
    #   x = x + cross_attn(norm2(x), memory)    (memory = original input)
    #   x = x + ffn(norm3(x))

    # --- self-attention block (fused QKV) ---
    n1 = layer_norm(x, ln1_w, ln1_b)
    qkv = mm(n1, sa_qkv_t) + sa_in_b
    sa = attend(qkv[:, 0:E], qkv[:, E:2 * E], qkv[:, 2 * E:3 * E])
    y = x + mm(sa, sa_out_t) + sa_out_b

    # --- cross-attention block (memory = original input x, fused KV) ---
    n2 = layer_norm(y, ln2_w, ln2_b)
    q2 = mm(n2, ca_q_t) + ca_in_b[:, 0:E]
    kv = mm(x, ca_kv_t) + ca_in_b[:, E:3 * E]
    ca = attend(q2, kv[:, 0:E], kv[:, E:2 * E])
    y = y + mm(ca, ca_out_t) + ca_out_b

    # --- feed-forward block ---
    n3 = layer_norm(y, ln3_w, ln3_b)
    h1 = jnp.maximum(mm(n3, ff1_t) + ff1_b, 0.0)       # ReLU (PyTorch default)
    y = y + mm(h1, ff2_t) + ff2_b

    o_ref[...] = y.astype(o_ref.dtype)


def pack_params(p, E, num_heads):
    """Pre-transpose, scale-fold and pack all parameters into one (10E+12, 4E) slab."""
    f32 = jnp.float32
    Dh = E // num_heads
    scale = 1.0 / (Dh ** 0.5)
    LANE = 4 * E

    def pad_cols(m):
        return jnp.pad(m.astype(f32), ((0, 0), (0, LANE - m.shape[-1])))

    def pad_vec(v):
        v = v.astype(f32).reshape(-1)
        return jnp.pad(v, (0, LANE - v.shape[0]))

    # self-attention: fold 1/sqrt(Dh) into the Q columns of W_qkv^T and Q bias.
    qscale = jnp.concatenate([jnp.full((E,), scale, f32), jnp.ones((2 * E,), f32)])
    sa_qkv_t = p["sa_in_w"].T * qscale[None, :]          # (E, 3E)
    sa_in_b = p["sa_in_b"].reshape(-1) * qscale          # (3E,)

    # cross-attention: split q / kv, fold scale into q.
    ca_in_w = p["ca_in_w"]
    ca_q_t = ca_in_w[0:E].T * scale                      # (E, E)
    ca_kv_t = ca_in_w[E:3 * E].T                         # (E, 2E)
    ca_in_b = p["ca_in_b"].reshape(-1)
    ca_b = jnp.concatenate([ca_in_b[0:E] * scale, ca_in_b[E:3 * E]])

    weight_rows = [
        pad_cols(sa_qkv_t),               # rows [0, E)
        pad_cols(p["sa_out_w"].T),        # [E, 2E)
        pad_cols(ca_q_t),                 # [2E, 3E)
        pad_cols(ca_kv_t),                # [3E, 4E)
        pad_cols(p["ca_out_w"].T),        # [4E, 5E)
        pad_cols(p["ff1_w"].T),           # [5E, 6E)
        pad_cols(p["ff2_w"].T),           # [6E, 10E)
    ]
    vec_rows = jnp.stack([
        pad_vec(p["ln1_w"]), pad_vec(p["ln1_b"]),
        pad_vec(p["ln2_w"]), pad_vec(p["ln2_b"]),
        pad_vec(p["ln3_w"]), pad_vec(p["ln3_b"]),
        pad_vec(sa_in_b),
        pad_vec(p["sa_out_b"]),
        pad_vec(ca_b),
        pad_vec(p["ca_out_b"]),
        pad_vec(p["ff1_b"]),
        pad_vec(p["ff2_b"]),
    ])                                    # (12, 4E)
    return jnp.concatenate(weight_rows + [vec_rows], axis=0)   # (10E+12, 4E)


def decoder_attention_forward(x, params, *, num_heads=2):
    """x: (B, S, E) float32. params: dict of weights (see init_params)."""
    B, S, E = x.shape
    BS = B * S

    slab = pack_params(params, E, num_heads)
    x2 = x.reshape(BS, E).astype(jnp.float32)

    # Block-diagonal additive mask keeps the B sequences independent while the
    # attention matmuls run over the fused (B*S) row dimension.
    bid = jnp.repeat(jnp.arange(B, dtype=jnp.int32), S)
    neg_mask = jnp.where(bid[:, None] == bid[None, :], 0.0, -1e30).astype(jnp.float32)

    kernel = functools.partial(decoder_layer_kernel, seq_len=S, num_heads=num_heads)
    y = pl.pallas_call(
        kernel,
        out_shape=jax.ShapeDtypeStruct((BS, E), x.dtype),
    )(x2, neg_mask, slab)
    return y.reshape(B, S, E)


def init_params(key, E):
    """Deterministic parameter init matching nn.TransformerDecoderLayer shapes."""
    ks = jax.random.split(key, 8)
    f32 = jnp.float32
    scale = 0.02

    def rnd(k, shape):
        return (scale * jax.random.normal(k, shape)).astype(f32)

    params = {
        # LayerNorms: PyTorch default init (weight=1, bias=0), stored as (1, E)
        "ln1_w": jnp.ones((1, E), f32), "ln1_b": jnp.zeros((1, E), f32),
        "ln2_w": jnp.ones((1, E), f32), "ln2_b": jnp.zeros((1, E), f32),
        "ln3_w": jnp.ones((1, E), f32), "ln3_b": jnp.zeros((1, E), f32),
        # self-attention (in_proj: (3E, E), out_proj: (E, E))
        "sa_in_w": rnd(ks[0], (3 * E, E)), "sa_in_b": jnp.zeros((1, 3 * E), f32),
        "sa_out_w": rnd(ks[1], (E, E)),    "sa_out_b": jnp.zeros((1, E), f32),
        # cross-attention ("multihead_attn" in PyTorch)
        "ca_in_w": rnd(ks[2], (3 * E, E)), "ca_in_b": jnp.zeros((1, 3 * E), f32),
        "ca_out_w": rnd(ks[3], (E, E)),    "ca_out_b": jnp.zeros((1, E), f32),
        # feed-forward: linear1 (4E, E), linear2 (E, 4E)
        "ff1_w": rnd(ks[4], (4 * E, E)), "ff1_b": jnp.zeros((1, 4 * E), f32),
        "ff2_w": rnd(ks[5], (E, 4 * E)), "ff2_b": jnp.zeros((1, E), f32),
    }
    return params


def reference_forward(x, p, num_heads=2):
    """Pure-JAX reference of the same norm-first decoder layer (for checking)."""
    B, S, E = x.shape
    H = num_heads
    Dh = E // H
    eps = 1e-5

    def ln(v, w, b):
        mu = jnp.mean(v, axis=-1, keepdims=True)
        var = jnp.mean((v - mu) ** 2, axis=-1, keepdims=True)
        return (v - mu) / jnp.sqrt(var + eps) * w[0] + b[0]

    def mha(q_in, kv_in, in_w, in_b, out_w, out_b):
        q = q_in @ in_w[0:E].T + in_b[0, 0:E]
        k = kv_in @ in_w[E:2 * E].T + in_b[0, E:2 * E]
        v = kv_in @ in_w[2 * E:3 * E].T + in_b[0, 2 * E:3 * E]
        q = q.reshape(B, S, H, Dh).transpose(0, 2, 1, 3)
        k = k.reshape(B, S, H, Dh).transpose(0, 2, 1, 3)
        v = v.reshape(B, S, H, Dh).transpose(0, 2, 1, 3)
        s = jnp.einsum("bhqd,bhkd->bhqk", q, k) / (Dh ** 0.5)
        pmat = jax.nn.softmax(s, axis=-1)
        o = jnp.einsum("bhqk,bhkd->bhqd", pmat, v)
        o = o.transpose(0, 2, 1, 3).reshape(B, S, E)
        return o @ out_w.T + out_b[0]

    def ffn(v):
        h = jnp.maximum(v @ p["ff1_w"].T + p["ff1_b"][0], 0.0)
        return h @ p["ff2_w"].T + p["ff2_b"][0]

    n1 = ln(x, p["ln1_w"], p["ln1_b"])
    y = x + mha(n1, n1, p["sa_in_w"], p["sa_in_b"], p["sa_out_w"], p["sa_out_b"])
    n2 = ln(y, p["ln2_w"], p["ln2_b"])
    y = y + mha(n2, x, p["ca_in_w"], p["ca_in_b"], p["ca_out_w"], p["ca_out_b"])
    n3 = ln(y, p["ln3_w"], p["ln3_b"])
    return y + ffn(n3)


if __name__ == "__main__":
    # Decoder_attention(input_size=32, hidden_nodes=64, output_size=32, batch_size=2)
    # hidden_nodes / output_size / depth are unused in the forward pass.
    B, S, E = 2, 8, 32

    key = jax.random.PRNGKey(0)
    k_x, k_p = jax.random.split(key)
    x = jax.random.normal(k_x, (B, S, E), dtype=jnp.float32)
    params = init_params(k_p, E)

    out = jax.block_until_ready(decoder_attention_forward(x, params, num_heads=2))
    ref = jax.block_until_ready(reference_forward(x, params, num_heads=2))

    assert out.shape == (B, S, E)
    # tolerance accounts for pl.reciprocal(approx=True) in the softmax denominator
    assert bool(jnp.allclose(out, ref, atol=2e-3, rtol=2e-3)), "mismatch vs JAX reference"

    print("KERNEL_OK")
</pallas_src>

<mosaic_0001>
module attributes {stable_mosaic.version = 11 : i64} {
  func.func @decoder_layer_kernel(%arg0: memref<16x32xf32, #tpu.memory_space<vmem>>, %arg1: memref<16x16xf32, #tpu.memory_space<vmem>>, %arg2: memref<332x128xf32, #tpu.memory_space<vmem>>, %arg3: memref<16x32xf32, #tpu.memory_space<vmem>>) attributes {dimension_semantics = [], scalar_prefetch = 0 : i64, scratch_operands = 0 : i64, tpu.core_type = #tpu.core_type<tc>} {
    %c0 = arith.constant 0 : index
    %c0_0 = arith.constant 0 : index
    %0 = vector.load %arg0[%c0, %c0_0] : memref<16x32xf32, #tpu.memory_space<vmem>>, vector<16x32xf32>
    %c320 = arith.constant 320 : index
    %c0_1 = arith.constant 0 : index
    %1 = vector.load %arg2[%c320, %c0_1] : memref<332x128xf32, #tpu.memory_space<vmem>>, vector<1x32xf32>
    %c321 = arith.constant 321 : index
    %c0_2 = arith.constant 0 : index
    %2 = vector.load %arg2[%c321, %c0_2] : memref<332x128xf32, #tpu.memory_space<vmem>>, vector<1x32xf32>
    %c322 = arith.constant 322 : index
    %c0_3 = arith.constant 0 : index
    %3 = vector.load %arg2[%c322, %c0_3] : memref<332x128xf32, #tpu.memory_space<vmem>>, vector<1x32xf32>
    %c323 = arith.constant 323 : index
    %c0_4 = arith.constant 0 : index
    %4 = vector.load %arg2[%c323, %c0_4] : memref<332x128xf32, #tpu.memory_space<vmem>>, vector<1x32xf32>
    %c324 = arith.constant 324 : index
    %c0_5 = arith.constant 0 : index
    %5 = vector.load %arg2[%c324, %c0_5] : memref<332x128xf32, #tpu.memory_space<vmem>>, vector<1x32xf32>
    %c325 = arith.constant 325 : index
    %c0_6 = arith.constant 0 : index
    %6 = vector.load %arg2[%c325, %c0_6] : memref<332x128xf32, #tpu.memory_space<vmem>>, vector<1x32xf32>
    %c326 = arith.constant 326 : index
    %c0_7 = arith.constant 0 : index
    %7 = vector.load %arg2[%c326, %c0_7] : memref<332x128xf32, #tpu.memory_space<vmem>>, vector<1x96xf32>
    %c327 = arith.constant 327 : index
    %c0_8 = arith.constant 0 : index
    %8 = vector.load %arg2[%c327, %c0_8] : memref<332x128xf32, #tpu.memory_space<vmem>>, vector<1x32xf32>
    %c328 = arith.constant 328 : index
    %c0_9 = arith.constant 0 : index
    %9 = vector.load %arg2[%c328, %c0_9] : memref<332x128xf32, #tpu.memory_space<vmem>>, vector<1x96xf32>
    %c329 = arith.constant 329 : index
    %c0_10 = arith.constant 0 : index
    %10 = vector.load %arg2[%c329, %c0_10] : memref<332x128xf32, #tpu.memory_space<vmem>>, vector<1x32xf32>
    %c330 = arith.constant 330 : index
    %c0_11 = arith.constant 0 : index
    %11 = vector.load %arg2[%c330, %c0_11] : memref<332x128xf32, #tpu.memory_space<vmem>>, vector<1x128xf32>
    %c331 = arith.constant 331 : index
    %c0_12 = arith.constant 0 : index
    %12 = vector.load %arg2[%c331, %c0_12] : memref<332x128xf32, #tpu.memory_space<vmem>>, vector<1x32xf32>
    %c0_13 = arith.constant 0 : index
    %c0_14 = arith.constant 0 : index
    %13 = vector.load %arg2[%c0_13, %c0_14] : memref<332x128xf32, #tpu.memory_space<vmem>>, vector<32x96xf32>
    %c32 = arith.constant 32 : index
    %c0_15 = arith.constant 0 : index
    %14 = vector.load %arg2[%c32, %c0_15] : memref<332x128xf32, #tpu.memory_space<vmem>>, vector<32x32xf32>
    %c64 = arith.constant 64 : index
    %c0_16 = arith.constant 0 : index
    %15 = vector.load %arg2[%c64, %c0_16] : memref<332x128xf32, #tpu.memory_space<vmem>>, vector<32x32xf32>
    %c96 = arith.constant 96 : index
    %c0_17 = arith.constant 0 : index
    %16 = vector.load %arg2[%c96, %c0_17] : memref<332x128xf32, #tpu.memory_space<vmem>>, vector<32x64xf32>
    %c128 = arith.constant 128 : index
    %c0_18 = arith.constant 0 : index
    %17 = vector.load %arg2[%c128, %c0_18] : memref<332x128xf32, #tpu.memory_space<vmem>>, vector<32x32xf32>
    %c160 = arith.constant 160 : index
    %c0_19 = arith.constant 0 : index
    %18 = vector.load %arg2[%c160, %c0_19] : memref<332x128xf32, #tpu.memory_space<vmem>>, vector<32x128xf32>
    %c192 = arith.constant 192 : index
    %c0_20 = arith.constant 0 : index
    %19 = vector.load %arg2[%c192, %c0_20] : memref<332x128xf32, #tpu.memory_space<vmem>>, vector<128x32xf32>
    %c0_21 = arith.constant 0 : index
    %c0_22 = arith.constant 0 : index
    %20 = vector.load %arg1[%c0_21, %c0_22] : memref<16x16xf32, #tpu.memory_space<vmem>>, vector<16x16xf32>
    %cst = arith.constant dense<0.000000e+00> : vector<16xf32>
    %21 = vector.multi_reduction <add>, %0, %cst [1] : vector<16x32xf32> to vector<16xf32>
    %22 = vector.shape_cast %21 : vector<16xf32> to vector<16x1xf32>
    %cst_23 = arith.constant 3.200000e+01 : f32
    %23 = vector.broadcast %cst_23 : f32 to vector<16x1xf32>
    %24 = arith.divf %22, %23 : vector<16x1xf32>
    %25 = vector.broadcast %24 : vector<16x1xf32> to vector<16x32xf32>
    %26 = arith.subf %0, %25 : vector<16x32xf32>
    %27 = arith.mulf %26, %26 : vector<16x32xf32>
    %cst_24 = arith.constant dense<0.000000e+00> : vector<16xf32>
    %28 = vector.multi_reduction <add>, %27, %cst_24 [1] : vector<16x32xf32> to vector<16xf32>
    %29 = vector.shape_cast %28 : vector<16xf32> to vector<16x1xf32>
    %cst_25 = arith.constant 3.200000e+01 : f32
    %30 = vector.broadcast %cst_25 : f32 to vector<16x1xf32>
    %31 = arith.divf %29, %30 : vector<16x1xf32>
    %cst_26 = arith.constant 9.99999974E-6 : f32
    %32 = vector.broadcast %cst_26 : f32 to vector<16x1xf32>
    %33 = arith.addf %31, %32 : vector<16x1xf32>
    %34 = math.rsqrt %33 : vector<16x1xf32>
    %35 = vector.broadcast %34 : vector<16x1xf32> to vector<16x32xf32>
    %36 = arith.mulf %26, %35 : vector<16x32xf32>
    %37 = vector.broadcast %1 : vector<1x32xf32> to vector<16x32xf32>
    %38 = arith.mulf %36, %37 : vector<16x32xf32>
    %39 = vector.broadcast %2 : vector<1x32xf32> to vector<16x32xf32>
    %40 = arith.addf %38, %39 : vector<16x32xf32>
    %cst_27 = arith.constant dense<0.000000e+00> : vector<16x96xf32>
    %41 = tpu.matmul %40, %13, %cst_27 {dimension_numbers = #tpu.dot_dimension_numbers<[1], [0], [0], [1], [0, 0, 1, 1], [], []>} : vector<16x32xf32>, vector<32x96xf32>, vector<16x96xf32> -> vector<16x96xf32>
    %42 = vector.broadcast %7 : vector<1x96xf32> to vector<16x96xf32>
    %43 = arith.addf %41, %42 : vector<16x96xf32>
    %44 = vector.extract_strided_slice %43 {offsets = [0, 0], sizes = [16, 32], strides = [1, 1]} : vector<16x96xf32> to vector<16x32xf32>
    %45 = vector.extract_strided_slice %43 {offsets = [0, 32], sizes = [16, 32], strides = [1, 1]} : vector<16x96xf32> to vector<16x32xf32>
    %46 = vector.extract_strided_slice %43 {offsets = [0, 64], sizes = [16, 32], strides = [1, 1]} : vector<16x96xf32> to vector<16x32xf32>
    %47 = vector.extract_strided_slice %44 {offsets = [0, 0], sizes = [16, 16], strides = [1, 1]} : vector<16x32xf32> to vector<16x16xf32>
    %48 = vector.extract_strided_slice %45 {offsets = [0, 0], sizes = [16, 16], strides = [1, 1]} : vector<16x32xf32> to vector<16x16xf32>
    %cst_28 = arith.constant dense<0.000000e+00> : vector<16x16xf32>
    %49 = tpu.matmul %47, %48, %cst_28 {dimension_numbers = #tpu.dot_dimension_numbers<[1], [1], [0], [0], [0, 0, 1, 0], [], []>} : vector<16x16xf32>, vector<16x16xf32>, vector<16x16xf32> -> vector<16x16xf32>
    %50 = arith.addf %49, %20 : vector<16x16xf32>
    %cst_29 = arith.constant dense<0xFF800000> : vector<16xf32>
    %51 = vector.multi_reduction <maximumf>, %50, %cst_29 [1] : vector<16x16xf32> to vector<16xf32>
    %52 = vector.shape_cast %51 : vector<16xf32> to vector<16x1xf32>
    %53 = vector.broadcast %52 : vector<16x1xf32> to vector<16x16xf32>
    %54 = arith.subf %50, %53 : vector<16x16xf32>
    %55 = math.exp %54 : vector<16x16xf32>
    %cst_30 = arith.constant dense<0.000000e+00> : vector<16xf32>
    %56 = vector.multi_reduction <add>, %55, %cst_30 [1] : vector<16x16xf32> to vector<16xf32>
    %57 = vector.shape_cast %56 : vector<16xf32> to vector<16x1xf32>
    %58 = tpu.reciprocal %57 {approx = true} : vector<16x1xf32> -> vector<16x1xf32>
    %59 = vector.broadcast %58 : vector<16x1xf32> to vector<16x16xf32>
    %60 = arith.mulf %55, %59 : vector<16x16xf32>
    %61 = vector.extract_strided_slice %46 {offsets = [0, 0], sizes = [16, 16], strides = [1, 1]} : vector<16x32xf32> to vector<16x16xf32>
    %cst_31 = arith.constant dense<0.000000e+00> : vector<16x16xf32>
    %62 = tpu.matmul %60, %61, %cst_31 {dimension_numbers = #tpu.dot_dimension_numbers<[1], [0], [0], [1], [0, 0, 1, 1], [], []>} : vector<16x16xf32>, vector<16x16xf32>, vector<16x16xf32> -> vector<16x16xf32>
    %63 = vector.extract_strided_slice %44 {offsets = [0, 16], sizes = [16, 16], strides = [1, 1]} : vector<16x32xf32> to vector<16x16xf32>
    %64 = vector.extract_strided_slice %45 {offsets = [0, 16], sizes = [16, 16], strides = [1, 1]} : vector<16x32xf32> to vector<16x16xf32>
    %cst_32 = arith.constant dense<0.000000e+00> : vector<16x16xf32>
    %65 = tpu.matmul %63, %64, %cst_32 {dimension_numbers = #tpu.dot_dimension_numbers<[1], [1], [0], [0], [0, 0, 1, 0], [], []>} : vector<16x16xf32>, vector<16x16xf32>, vector<16x16xf32> -> vector<16x16xf32>
    %66 = arith.addf %65, %20 : vector<16x16xf32>
    %cst_33 = arith.constant dense<0xFF800000> : vector<16xf32>
    %67 = vector.multi_reduction <maximumf>, %66, %cst_33 [1] : vector<16x16xf32> to vector<16xf32>
    %68 = vector.shape_cast %67 : vector<16xf32> to vector<16x1xf32>
    %69 = vector.broadcast %68 : vector<16x1xf32> to vector<16x16xf32>
    %70 = arith.subf %66, %69 : vector<16x16xf32>
    %71 = math.exp %70 : vector<16x16xf32>
    %cst_34 = arith.constant dense<0.000000e+00> : vector<16xf32>
    %72 = vector.multi_reduction <add>, %71, %cst_34 [1] : vector<16x16xf32> to vector<16xf32>
    %73 = vector.shape_cast %72 : vector<16xf32> to vector<16x1xf32>
    %74 = tpu.reciprocal %73 {approx = true} : vector<16x1xf32> -> vector<16x1xf32>
    %75 = vector.broadcast %74 : vector<16x1xf32> to vector<16x16xf32>
    %76 = arith.mulf %71, %75 : vector<16x16xf32>
    %77 = vector.extract_strided_slice %46 {offsets = [0, 16], sizes = [16, 16], strides = [1, 1]} : vector<16x32xf32> to vector<16x16xf32>
    %cst_35 = arith.constant dense<0.000000e+00> : vector<16x16xf32>
    %78 = tpu.matmul %76, %77, %cst_35 {dimension_numbers = #tpu.dot_dimension_numbers<[1], [0], [0], [1], [0, 0, 1, 1], [], []>} : vector<16x16xf32>, vector<16x16xf32>, vector<16x16xf32> -> vector<16x16xf32>
    %79 = tpu.concatenate %62, %78 in 1 : vector<16x16xf32>, vector<16x16xf32> -> vector<16x32xf32>
    %cst_36 = arith.constant dense<0.000000e+00> : vector<16x32xf32>
    %80 = tpu.matmul %79, %14, %cst_36 {dimension_numbers = #tpu.dot_dimension_numbers<[1], [0], [0], [1], [0, 0, 1, 1], [], []>} : vector<16x32xf32>, vector<32x32xf32>, vector<16x32xf32> -> vector<16x32xf32>
    %81 = arith.addf %0, %80 : vector<16x32xf32>
    %82 = vector.broadcast %8 : vector<1x32xf32> to vector<16x32xf32>
    %83 = arith.addf %81, %82 : vector<16x32xf32>
    %cst_37 = arith.constant dense<0.000000e+00> : vector<16xf32>
    %84 = vector.multi_reduction <add>, %83, %cst_37 [1] : vector<16x32xf32> to vector<16xf32>
    %85 = vector.shape_cast %84 : vector<16xf32> to vector<16x1xf32>
    %cst_38 = arith.constant 3.200000e+01 : f32
    %86 = vector.broadcast %cst_38 : f32 to vector<16x1xf32>
    %87 = arith.divf %85, %86 : vector<16x1xf32>
    %88 = vector.broadcast %87 : vector<16x1xf32> to vector<16x32xf32>
    %89 = arith.subf %83, %88 : vector<16x32xf32>
    %90 = arith.mulf %89, %89 : vector<16x32xf32>
    %cst_39 = arith.constant dense<0.000000e+00> : vector<16xf32>
    %91 = vector.multi_reduction <add>, %90, %cst_39 [1] : vector<16x32xf32> to vector<16xf32>
    %92 = vector.shape_cast %91 : vector<16xf32> to vector<16x1xf32>
    %cst_40 = arith.constant 3.200000e+01 : f32
    %93 = vector.broadcast %cst_40 : f32 to vector<16x1xf32>
    %94 = arith.divf %92, %93 : vector<16x1xf32>
    %cst_41 = arith.constant 9.99999974E-6 : f32
    %95 = vector.broadcast %cst_41 : f32 to vector<16x1xf32>
    %96 = arith.addf %94, %95 : vector<16x1xf32>
    %97 = math.rsqrt %96 : vector<16x1xf32>
    %98 = vector.broadcast %97 : vector<16x1xf32> to vector<16x32xf32>
    %99 = arith.mulf %89, %98 : vector<16x32xf32>
    %100 = vector.broadcast %3 : vector<1x32xf32> to vector<16x32xf32>
    %101 = arith.mulf %99, %100 : vector<16x32xf32>
    %102 = vector.broadcast %4 : vector<1x32xf32> to vector<16x32xf32>
    %103 = arith.addf %101, %102 : vector<16x32xf32>
    %cst_42 = arith.constant dense<0.000000e+00> : vector<16x32xf32>
    %104 = tpu.matmul %103, %15, %cst_42 {dimension_numbers = #tpu.dot_dimension_numbers<[1], [0], [0], [1], [0, 0, 1, 1], [], []>} : vector<16x32xf32>, vector<32x32xf32>, vector<16x32xf32> -> vector<16x32xf32>
    %105 = vector.extract_strided_slice %9 {offsets = [0, 0], sizes = [1, 32], strides = [1, 1]} : vector<1x96xf32> to vector<1x32xf32>
    %106 = vector.broadcast %105 : vector<1x32xf32> to vector<16x32xf32>
    %107 = arith.addf %104, %106 : vector<16x32xf32>
    %cst_43 = arith.constant dense<0.000000e+00> : vector<16x64xf32>
    %108 = tpu.matmul %0, %16, %cst_43 {dimension_numbers = #tpu.dot_dimension_numbers<[1], [0], [0], [1], [0, 0, 1, 1], [], []>} : vector<16x32xf32>, vector<32x64xf32>, vector<16x64xf32> -> vector<16x64xf32>
    %109 = vector.extract_strided_slice %9 {offsets = [0, 32], sizes = [1, 64], strides = [1, 1]} : vector<1x96xf32> to vector<1x64xf32>
    %110 = vector.broadcast %109 : vector<1x64xf32> to vector<16x64xf32>
    %111 = arith.addf %108, %110 : vector<16x64xf32>
    %112 = vector.extract_strided_slice %111 {offsets = [0, 0], sizes = [16, 32], strides = [1, 1]} : vector<16x64xf32> to vector<16x32xf32>
    %113 = vector.extract_strided_slice %111 {offsets = [0, 32], sizes = [16, 32], strides = [1, 1]} : vector<16x64xf32> to vector<16x32xf32>
    %114 = vector.extract_strided_slice %107 {offsets = [0, 0], sizes = [16, 16], strides = [1, 1]} : vector<16x32xf32> to vector<16x16xf32>
    %115 = vector.extract_strided_slice %112 {offsets = [0, 0], sizes = [16, 16], strides = [1, 1]} : vector<16x32xf32> to vector<16x16xf32>
    %cst_44 = arith.constant dense<0.000000e+00> : vector<16x16xf32>
    %116 = tpu.matmul %114, %115, %cst_44 {dimension_numbers = #tpu.dot_dimension_numbers<[1], [1], [0], [0], [0, 0, 1, 0], [], []>} : vector<16x16xf32>, vector<16x16xf32>, vector<16x16xf32> -> vector<16x16xf32>
    %117 = arith.addf %116, %20 : vector<16x16xf32>
    %cst_45 = arith.constant dense<0xFF800000> : vector<16xf32>
    %118 = vector.multi_reduction <maximumf>, %117, %cst_45 [1] : vector<16x16xf32> to vector<16xf32>
    %119 = vector.shape_cast %118 : vector<16xf32> to vector<16x1xf32>
    %120 = vector.broadcast %119 : vector<16x1xf32> to vector<16x16xf32>
    %121 = arith.subf %117, %120 : vector<16x16xf32>
    %122 = math.exp %121 : vector<16x16xf32>
    %cst_46 = arith.constant dense<0.000000e+00> : vector<16xf32>
    %123 = vector.multi_reduction <add>, %122, %cst_46 [1] : vector<16x16xf32> to vector<16xf32>
    %124 = vector.shape_cast %123 : vector<16xf32> to vector<16x1xf32>
    %125 = tpu.reciprocal %124 {approx = true} : vector<16x1xf32> -> vector<16x1xf32>
    %126 = vector.broadcast %125 : vector<16x1xf32> to vector<16x16xf32>
    %127 = arith.mulf %122, %126 : vector<16x16xf32>
    %128 = vector.extract_strided_slice %113 {offsets = [0, 0], sizes = [16, 16], strides = [1, 1]} : vector<16x32xf32> to vector<16x16xf32>
    %cst_47 = arith.constant dense<0.000000e+00> : vector<16x16xf32>
    %129 = tpu.matmul %127, %128, %cst_47 {dimension_numbers = #tpu.dot_dimension_numbers<[1], [0], [0], [1], [0, 0, 1, 1], [], []>} : vector<16x16xf32>, vector<16x16xf32>, vector<16x16xf32> -> vector<16x16xf32>
    %130 = vector.extract_strided_slice %107 {offsets = [0, 16], sizes = [16, 16], strides = [1, 1]} : vector<16x32xf32> to vector<16x16xf32>
    %131 = vector.extract_strided_slice %112 {offsets = [0, 16], sizes = [16, 16], strides = [1, 1]} : vector<16x32xf32> to vector<16x16xf32>
    %cst_48 = arith.constant dense<0.000000e+00> : vector<16x16xf32>
    %132 = tpu.matmul %130, %131, %cst_48 {dimension_numbers = #tpu.dot_dimension_numbers<[1], [1], [0], [0], [0, 0, 1, 0], [], []>} : vector<16x16xf32>, vector<16x16xf32>, vector<16x16xf32> -> vector<16x16xf32>
    %133 = arith.addf %132, %20 : vector<16x16xf32>
    %cst_49 = arith.constant dense<0xFF800000> : vector<16xf32>
    %134 = vector.multi_reduction <maximumf>, %133, %cst_49 [1] : vector<16x16xf32> to vector<16xf32>
    %135 = vector.shape_cast %134 : vector<16xf32> to vector<16x1xf32>
    %136 = vector.broadcast %135 : vector<16x1xf32> to vector<16x16xf32>
    %137 = arith.subf %133, %136 : vector<16x16xf32>
    %138 = math.exp %137 : vector<16x16xf32>
    %cst_50 = arith.constant dense<0.000000e+00> : vector<16xf32>
    %139 = vector.multi_reduction <add>, %138, %cst_50 [1] : vector<16x16xf32> to vector<16xf32>
    %140 = vector.shape_cast %139 : vector<16xf32> to vector<16x1xf32>
    %141 = tpu.reciprocal %140 {approx = true} : vector<16x1xf32> -> vector<16x1xf32>
    %142 = vector.broadcast %141 : vector<16x1xf32> to vector<16x16xf32>
    %143 = arith.mulf %138, %142 : vector<16x16xf32>
    %144 = vector.extract_strided_slice %113 {offsets = [0, 16], sizes = [16, 16], strides = [1, 1]} : vector<16x32xf32> to vector<16x16xf32>
    %cst_51 = arith.constant dense<0.000000e+00> : vector<16x16xf32>
    %145 = tpu.matmul %143, %144, %cst_51 {dimension_numbers = #tpu.dot_dimension_numbers<[1], [0], [0], [1], [0, 0, 1, 1], [], []>} : vector<16x16xf32>, vector<16x16xf32>, vector<16x16xf32> -> vector<16x16xf32>
    %146 = tpu.concatenate %129, %145 in 1 : vector<16x16xf32>, vector<16x16xf32> -> vector<16x32xf32>
    %cst_52 = arith.constant dense<0.000000e+00> : vector<16x32xf32>
    %147 = tpu.matmul %146, %17, %cst_52 {dimension_numbers = #tpu.dot_dimension_numbers<[1], [0], [0], [1], [0, 0, 1, 1], [], []>} : vector<16x32xf32>, vector<32x32xf32>, vector<16x32xf32> -> vector<16x32xf32>
    %148 = arith.addf %83, %147 : vector<16x32xf32>
    %149 = vector.broadcast %10 : vector<1x32xf32> to vector<16x32xf32>
    %150 = arith.addf %148, %149 : vector<16x32xf32>
    %cst_53 = arith.constant dense<0.000000e+00> : vector<16xf32>
    %151 = vector.multi_reduction <add>, %150, %cst_53 [1] : vector<16x32xf32> to vector<16xf32>
    %152 = vector.shape_cast %151 : vector<16xf32> to vector<16x1xf32>
    %cst_54 = arith.constant 3.200000e+01 : f32
    %153 = vector.broadcast %cst_54 : f32 to vector<16x1xf32>
    %154 = arith.divf %152, %153 : vector<16x1xf32>
    %155 = vector.broadcast %154 : vector<16x1xf32> to vector<16x32xf32>
    %156 = arith.subf %150, %155 : vector<16x32xf32>
    %157 = arith.mulf %156, %156 : vector<16x32xf32>
    %cst_55 = arith.constant dense<0.000000e+00> : vector<16xf32>
    %158 = vector.multi_reduction <add>, %157, %cst_55 [1] : vector<16x32xf32> to vector<16xf32>
    %159 = vector.shape_cast %158 : vector<16xf32> to vector<16x1xf32>
    %cst_56 = arith.constant 3.200000e+01 : f32
    %160 = vector.broadcast %cst_56 : f32 to vector<16x1xf32>
    %161 = arith.divf %159, %160 : vector<16x1xf32>
    %cst_57 = arith.constant 9.99999974E-6 : f32
    %162 = vector.broadcast %cst_57 : f32 to vector<16x1xf32>
    %163 = arith.addf %161, %162 : vector<16x1xf32>
    %164 = math.rsqrt %163 : vector<16x1xf32>
    %165 = vector.broadcast %164 : vector<16x1xf32> to vector<16x32xf32>
    %166 = arith.mulf %156, %165 : vector<16x32xf32>
    %167 = vector.broadcast %5 : vector<1x32xf32> to vector<16x32xf32>
    %168 = arith.mulf %166, %167 : vector<16x32xf32>
    %169 = vector.broadcast %6 : vector<1x32xf32> to vector<16x32xf32>
    %170 = arith.addf %168, %169 : vector<16x32xf32>
    %cst_58 = arith.constant dense<0.000000e+00> : vector<16x128xf32>
    %171 = tpu.matmul %170, %18, %cst_58 {dimension_numbers = #tpu.dot_dimension_numbers<[1], [0], [0], [1], [0, 0, 1, 1], [], []>} : vector<16x32xf32>, vector<32x128xf32>, vector<16x128xf32> -> vector<16x128xf32>
    %172 = vector.broadcast %11 : vector<1x128xf32> to vector<16x128xf32>
    %173 = arith.addf %171, %172 : vector<16x128xf32>
    %cst_59 = arith.constant 0.000000e+00 : f32
    %174 = vector.broadcast %cst_59 : f32 to vector<16x128xf32>
    %175 = arith.maximumf %173, %174 : vector<16x128xf32>
    %cst_60 = arith.constant dense<0.000000e+00> : vector<16x32xf32>
    %176 = tpu.matmul %175, %19, %cst_60 {dimension_numbers = #tpu.dot_dimension_numbers<[1], [0], [0], [1], [0, 0, 1, 1], [], []>} : vector<16x128xf32>, vector<128x32xf32>, vector<16x32xf32> -> vector<16x32xf32>
    %177 = arith.addf %150, %176 : vector<16x32xf32>
    %178 = vector.broadcast %12 : vector<1x32xf32> to vector<16x32xf32>
    %179 = arith.addf %177, %178 : vector<16x32xf32>
    %c0_61 = arith.constant 0 : index
    %c0_62 = arith.constant 0 : index
    %180 = vector.load %arg3[%c0_61, %c0_62] : memref<16x32xf32, #tpu.memory_space<vmem>>, vector<16x32xf32>
    tpu.vector_store %arg3[%c0_61, %c0_62], %179 {strides = array<i32>} : memref<16x32xf32, #tpu.memory_space<vmem>>, vector<16x32xf32>,
    return
  }
}

</mosaic_0001>

<llo_original>
// kernel: tpu_custom_call.1
$region0: #{tpu_custom_call.1}
  #allocation0 [shape = 'u32[]', space=smem, size = 0x4, offset = 0x4, fixed_abs, tag = 'smem constant byte address 0x4 - core index']
  #allocation1 [shape = 'u32[144,128]{1,0:T(1,128)}', space=vmem, size = 0x12000, scoped, tag = 'internal scratch']
  %s0 = inlined_call_operand.hbm [shape: f32[16,32], index: 0, kind: input, shape index: {}]
  %s1 = inlined_call_operand.hbm [shape: f32[16,16], index: 1, kind: input, shape index: {}]
  %s2 = inlined_call_operand.hbm [shape: f32[332,128], index: 2, kind: input, shape index: {}]
  %s3 = inlined_call_operand.hbm [shape: f32[16,32], index: 3, kind: output, shape index: {}]
  %s4 = sld [smem:[#allocation0]]
  $region34: #{tpu_custom_call.1} parent=0
    _
  %s6 = ssub.s32 1, %s4
  %s7 = scalar_select 0, %s6, %s4
  $region1: #{tpu_custom_call.1} parent=0
    #allocation2 [shape = 'u8[8192]{0}', space=vmem, size = 0x2000, scoped, tag = 'input window, operand 0, single buffered']
    #allocation3 [shape = 's32[1]{0}', space=sflag, size = 0x4, scoped, tag = 'scoped memory for tpu_custom_call.1']
    #allocation4 [shape = 's32[1]{0}', space=sflag, size = 0x4, scoped, tag = 'scoped memory for tpu_custom_call.1']
    #allocation5 [shape = 'u8[8192]{0}', space=vmem, size = 0x2000, scoped, tag = 'input window, operand 1, single buffered']
    #allocation6 [shape = 's32[1]{0}', space=sflag, size = 0x4, scoped, tag = 'scoped memory for tpu_custom_call.1']
    #allocation7 [shape = 'u8[172032]{0}', space=vmem, size = 0x2a000, scoped, tag = 'input window, operand 2, single buffered']
    #allocation8 [shape = 'u8[8192]{0}', space=vmem, size = 0x2000, scoped, tag = 'output window, operand 0, single buffered']
    %8 = vsyncpa [#allocation3], 0
    %9 = vsyncpa [#allocation6], 0
    %10 = vsyncpa [#allocation4], 0
    // Predicated region
    $region2: #{tpu_custom_call.1} parent=1 // pred_check
      _
    $region3: #{tpu_custom_call.1} parent=1 // pred_check_branch
      %12 = sbr.rel (0) target = $region5
    $region4: #{tpu_custom_call.1} parent=1 // pred_region
      %s14 = ssub.s32 256, 256
      %15 = vsyncadd [#allocation3], %s14
      %s16 = sshll.u32 [#allocation2], 4
      %s17 = int_to_ptr.vmem [resolvable:$true] %s16
      %22 = dma.hbm_to_vmem [thread:$0]  %s0, 256, %s17, [#allocation3], 128, 128, 8
    $region5: #{tpu_custom_call.1} parent=1 // pred_fallthru
      _
    // Predicated region
    $region6: #{tpu_custom_call.1} parent=1 // pred_check
      _
    $region7: #{tpu_custom_call.1} parent=1 // pred_check_branch
      %24 = sbr.rel (0) target = $region9
    $region8: #{tpu_custom_call.1} parent=1 // pred_region
      %s26 = ssub.s32 256, 256
      %27 = vsyncadd [#allocation6], %s26
      %s28 = sshll.u32 [#allocation5], 4
      %s29 = int_to_ptr.vmem [resolvable:$true] %s28
      %34 = dma.hbm_to_vmem [thread:$0]  %s1, 256, %s29, [#allocation6], 128, 128, 8
    $region9: #{tpu_custom_call.1} parent=1 // pred_fallthru
      _
    // Predicated region
    $region10: #{tpu_custom_call.1} parent=1 // pred_check
      _
    $region11: #{tpu_custom_call.1} parent=1 // pred_check_branch
      %36 = sbr.rel (0) target = $region13
    $region12: #{tpu_custom_call.1} parent=1 // pred_region
      %s38 = ssub.s32 5376, 5376
      %39 = vsyncadd [#allocation6], %s38
      %s40 = sshll.u32 [#allocation7], 4
      %s41 = int_to_ptr.vmem [resolvable:$true] %s40
      %46 = dma.hbm_to_vmem [thread:$0]  %s2, 5376, %s41, [#allocation6], 128, 128, 8
    $region13: #{tpu_custom_call.1} parent=1 // pred_fallthru
      _
    // Predicated region
    $region14: #{tpu_custom_call.1} parent=1 // pred_check
      _
    $region15: #{tpu_custom_call.1} parent=1 // pred_check_branch
      %48 = sbr.rel (0) target = $region17
    $region16: #{tpu_custom_call.1} parent=1 // pred_region
      %49 = dma.done [#allocation3], 256
    $region17: #{tpu_custom_call.1} parent=1 // pred_fallthru
      _
    // Predicated region
    $region18: #{tpu_custom_call.1} parent=1 // pred_check
      _
    $region19: #{tpu_custom_call.1} parent=1 // pred_check_branch
      %51 = sbr.rel (0) target = $region21
    $region20: #{tpu_custom_call.1} parent=1 // pred_region
      %52 = dma.done [#allocation6], 256
    $region21: #{tpu_custom_call.1} parent=1 // pred_fallthru
      _
    // Predicated region
    $region22: #{tpu_custom_call.1} parent=1 // pred_check
      _
    $region23: #{tpu_custom_call.1} parent=1 // pred_check_branch
      %54 = sbr.rel (0) target = $region25
    $region24: #{tpu_custom_call.1} parent=1 // pred_region
      %55 = dma.done [#allocation6], 5376
    $region25: #{tpu_custom_call.1} parent=1 // pred_fallthru
      _
    %v56 = vld [vmem:[#allocation2] sm:$0xff]
    %v57 = vld [vmem:[#allocation2 + $0x8] sm:$0xff]
    %v58 = vld [vmem:[#allocation7 + $0x140] sm:$0x1]
    %v59 = vld [vmem:[#allocation7 + $0x141] sm:$0x1]
    %v60 = vld [vmem:[#allocation7 + $0x142] sm:$0x1]
    %v61 = vld [vmem:[#allocation7 + $0x143] sm:$0x1]
    %v62 = vld [vmem:[#allocation7 + $0x144] sm:$0x1]
    %v63 = vld [vmem:[#allocation7 + $0x145] sm:$0x1]
    %v64 = vld [vmem:[#allocation7 + $0x146] sm:$0x1]
    %v65 = vld [vmem:[#allocation7 + $0x147] sm:$0x1]
    %v66 = vld [vmem:[#allocation7 + $0x148] sm:$0x1]
    %v67 = vld [vmem:[#allocation7 + $0x149] sm:$0x1]
    %v68 = vld [vmem:[#allocation7 + $0x14a] sm:$0x1]
    %v69 = vld [vmem:[#allocation7 + $0x14b] sm:$0x1]
    %v70 = vld [vmem:[#allocation7] sm:$0xff]
    %v71 = vld [vmem:[#allocation7 + $0x8] sm:$0xff]
    %v72 = vld [vmem:[#allocation7 + $0x10] sm:$0xff]
    %v73 = vld [vmem:[#allocation7 + $0x18] sm:$0xff]
    %v74 = vld [vmem:[#allocation7 + $0x20] sm:$0xff]
    %v75 = vld [vmem:[#allocation7 + $0x28] sm:$0xff]
    %v76 = vld [vmem:[#allocation7 + $0x30] sm:$0xff]
    %v77 = vld [vmem:[#allocation7 + $0x38] sm:$0xff]
    %v78 = vld [vmem:[#allocation7 + $0x40] sm:$0xff]
    %v79 = vld [vmem:[#allocation7 + $0x48] sm:$0xff]
    %v80 = vld [vmem:[#allocation7 + $0x50] sm:$0xff]
    %v81 = vld [vmem:[#allocation7 + $0x58] sm:$0xff]
    %v82 = vld [vmem:[#allocation7 + $0x60] sm:$0xff]
    %v83 = vld [vmem:[#allocation7 + $0x68] sm:$0xff]
    %v84 = vld [vmem:[#allocation7 + $0x70] sm:$0xff]
    %v85 = vld [vmem:[#allocation7 + $0x78] sm:$0xff]
    %v86 = vld [vmem:[#allocation7 + $0x80] sm:$0xff]
    %v87 = vld [vmem:[#allocation7 + $0x88] sm:$0xff]
    %v88 = vld [vmem:[#allocation7 + $0x90] sm:$0xff]
    %v89 = vld [vmem:[#allocation7 + $0x98] sm:$0xff]
    %v90 = vld [vmem:[#allocation7 + $0xa0] sm:$0xff]
    %v91 = vld [vmem:[#allocation7 + $0xa8] sm:$0xff]
    %v92 = vld [vmem:[#allocation7 + $0xb0] sm:$0xff]
    %v93 = vld [vmem:[#allocation7 + $0xb8] sm:$0xff]
    %v94 = vld [vmem:[#allocation7 + $0xc0] sm:$0xff]
    %v95 = vld [vmem:[#allocation7 + $0xc8] sm:$0xff]
    %v96 = vld [vmem:[#allocation7 + $0xd0] sm:$0xff]
    %v97 = vld [vmem:[#allocation7 + $0xd8] sm:$0xff]
    %v98 = vld [vmem:[#allocation7 + $0xe0] sm:$0xff]
    %v99 = vld [vmem:[#allocation7 + $0xe8] sm:$0xff]
    %v100 = vld [vmem:[#allocation7 + $0xf0] sm:$0xff]
    %v101 = vld [vmem:[#allocation7 + $0xf8] sm:$0xff]
    %v102 = vld [vmem:[#allocation7 + $0x100] sm:$0xff]
    %v103 = vld [vmem:[#allocation7 + $0x108] sm:$0xff]
    %v104 = vld [vmem:[#allocation7 + $0x110] sm:$0xff]
    %v105 = vld [vmem:[#allocation7 + $0x118] sm:$0xff]
    %v106 = vld [vmem:[#allocation7 + $0x120] sm:$0xff]
    %v107 = vld [vmem:[#allocation7 + $0x128] sm:$0xff]
    %v108 = vld [vmem:[#allocation7 + $0x130] sm:$0xff]
    %v109 = vld [vmem:[#allocation7 + $0x138] sm:$0xff]
    %v110 = vld [vmem:[#allocation5] sm:$0xff]
    %v111 = vld [vmem:[#allocation5 + $0x8] sm:$0xff]
    %vm112 = vcmask 261120
    %v113 = vsel %vm112, %v56, 0.0
    %114 = vadd.xlane.f32.xlu0 %v113
    %v115 = vpop.xlane.xlu0 %114
    %v116 = vsel %vm112, %v57, 0.0
    %117 = vadd.xlane.f32.xlu0 %v116
    %v118 = vpop.xlane.xlu0 %117
    %v119 = vrcp.pop 32.0
    %v120 = vmul.f32 %v115, %v119
    %v121 = vmul.f32 %v118, %v119
    %v122 = vsub.f32 %v56, %v120
    %v123 = vsub.f32 %v57, %v121
    %v124 = vmul.f32 %v122, %v122
    %v125 = vmul.f32 %v123, %v123
    %v126 = vsel %vm112, %v124, 0.0
    %127 = vadd.xlane.f32.xlu0 %v126
    %v128 = vpop.xlane.xlu0 %127
    %v129 = vsel %vm112, %v125, 0.0
    %130 = vadd.xlane.f32.xlu0 %v129
    %v131 = vpop.xlane.xlu0 %130
    %v132 = vmul.f32 %v128, %v119
    %v133 = vmul.f32 %v131, %v119
    %v134 = vadd.f32 %v132, 1e-05
    %v135 = vadd.f32 %v133, 1e-05
    %v136 = vrsqrt.pop %v134
    %v137 = vrsqrt.pop %v135
    %v138 = vmul.f32 %v122, %v136
    %v139 = vmul.f32 %v123, %v137
    %v140 = vlaneseq
    %v141 = vshrl.u32 %v140, 7
    %v142 = vsub.s32 0, %v141
    %v143 = vrot.slane %v58, %v142
    %v144 = vmul.f32 %v138, %v143
    %v145 = vmul.f32 %v139, %v143
    %v146 = vlaneseq
    %v147 = vshrl.u32 %v146, 7
    %v148 = vsub.s32 0, %v147
    %v149 = vrot.slane %v59, %v148
    %v150 = vadd.f32 %v144, %v149
    %v151 = vadd.f32 %v145, %v149
    %v152 = vlaneseq
    %v153 = vshrl.u32 %v152, 7
    %v154 = vsub.s32 0, %v153
    %v155 = vrot.slane %v64, %v154
    %v157 = vsel %vm112, %v150, 0
    %v160 = vsel %vm112, %v151, 0
    %162 = vmatprep.subr.mxu0 0.0
    %163 = vmatpush1.msra.mxu0 %v70
    %164 = vmatprep.subr.mxu0 0.0
    %165 = vmatpush1.msra.mxu0 %v71
    %166 = vmatprep.subr.mxu0 0.0
    %167 = vmatpush1.msra.mxu0 %v72
    %168 = vmatprep.subr.mxu0 0.0
    %169 = vmatpush1.msra.mxu0 %v73
    %170 = vmatprep.subr.mxu0 0.0
    %171 = vmatpush1.msra.mxu0 0.0
    %172 = vmatprep.subr.mxu0 0.0
    %173 = vmatpush1.msra.mxu0 0.0
    %174 = vmatprep.subr.mxu0 0.0
    %175 = vmatpush1.msra.mxu0 0.0
    %176 = vmatprep.subr.mxu0 0.0
    %177 = vmatpush1.msra.mxu0 0.0
    %178 = vmatprep.subr.mxu0 0.0
    %179 = vmatpush1.msra.mxu0 0.0
    %180 = vmatprep.subr.mxu0 0.0
    %181 = vmatpush1.msra.mxu0 0.0
    %182 = vmatprep.subr.mxu0 0.0
    %183 = vmatpush1.msra.mxu0 0.0
    %184 = vmatprep.subr.mxu0 0.0
    %185 = vmatpush1.msra.mxu0 0.0
    %186 = vmatprep.subr.mxu0 0.0
    %187 = vmatpush1.msra.mxu0 0.0
    %188 = vmatprep.subr.mxu0 0.0
    %189 = vmatpush1.msra.mxu0 0.0
    %190 = vmatprep.subr.mxu0 0.0
    %191 = vmatpush1.msra.mxu0 0.0
    %192 = vmatprep.subr.mxu0 0.0
    %193 = vmatpush1.msra.mxu0 0.0
    %194 = vmatprep.subr.mxu0 0.0
    %195 = vmatpush1.msra.mxu0 0.0
    %196 = vmatprep.subr.mxu0 0.0
    %197 = vmatpush1.msra.mxu0 0.0
    %198 = vmatprep.subr.mxu0 0.0
    %199 = vmatpush1.msra.mxu0 0.0
    %200 = vmatprep.subr.mxu0 0.0
    %201 = vmatpush1.msra.mxu0 0.0
    %202 = vmatprep.subr.mxu0 0.0
    %203 = vmatpush1.msra.mxu0 0.0
    %204 = vmatprep.subr.mxu0 0.0
    %205 = vmatpush1.msra.mxu0 0.0
    %206 = vmatprep.subr.mxu0 0.0
    %207 = vmatpush1.msra.mxu0 0.0
    %208 = vmatprep.subr.mxu0 0.0
    %209 = vmatpush1.msra.mxu0 0.0
    %210 = vmatprep.subr.mxu0 0.0
    %211 = vmatpush1.msra.mxu0 0.0
    %212 = vmatprep.subr.mxu0 0.0
    %213 = vmatpush1.msra.mxu0 0.0
    %214 = vmatprep.subr.mxu0 0.0
    %215 = vmatpush1.msra.mxu0 0.0
    %216 = vmatprep.subr.mxu0 0.0
    %217 = vmatpush1.msra.mxu0 0.0
    %218 = vmatprep.subr.mxu0 0.0
    %219 = vmatpush1.msra.mxu0 0.0
    %220 = vmatprep.subr.mxu0 0.0
    %221 = vmatpush1.msra.mxu0 0.0
    %222 = vmatprep.subr.mxu0 0.0
    %223 = vmatpush1.msra.mxu0 0.0
    %224 = vmatprep.subr.mxu0 0.0
    %225 = vmatpush1.msra.mxu0 0.0
    %226 = vmatprep.mubr.f32.mxu0 0.0
    %227 = vmatmul.mubr.f32.gmra.mrb[0].mxu0 %v157
    %v228 = vpop.f32.mrb[0].mxu0
    %v229 = vadd.f32 %v155, %v228
    %v230 = vpop.f32.mrb[0].mxu0
    %231 = vmatprep.mubr.f32.mxu0 0.0
    %232 = vmatmul.mubr.f32.gmra.mrb[0].mxu0 %v160
    %v233 = vpop.f32.mrb[0].mxu0
    %v234 = vadd.f32 %v155, %v233
    %v235 = vpop.f32.mrb[0].mxu0
    %236 = vdwg.mxu0
    %239 = vrot.lane.b32.xlu0 %v229, 96
    %v240 = vpop.permute.xlu0 %239
    %241 = vrot.lane.b32.xlu0 %v234, 96
    %v242 = vpop.permute.xlu0 %241
    %vm243 = vcmask 130048
    %v244 = vsel %vm243, %v229, 0
    %v246 = vsel %vm243, %v234, 0
    %v248 = vsel %vm243, %v240, 0
    %v250 = vsel %vm243, %v242, 0
    %252 = vmatprep.subr.mxu0 0.0
    %253 = vmatpush1.xpose.msra.mxu0 %v248
    %254 = vmatprep.subr.mxu0 0.0
    %255 = vmatpush1.xpose.msra.mxu0 %v250
    %256 = vmatprep.subr.mxu0 0.0
    %257 = vmatpush1.xpose.msra.mxu0 0.0
    %258 = vmatprep.subr.mxu0 0.0
    %259 = vmatpush1.xpose.msra.mxu0 0.0
    %260 = vmatprep.subr.mxu0 0.0
    %261 = vmatpush1.xpose.msra.mxu0 0.0
    %262 = vmatprep.subr.mxu0 0.0
    %263 = vmatpush1.xpose.msra.mxu0 0.0
    %264 = vmatprep.subr.mxu0 0.0
    %265 = vmatpush1.xpose.msra.mxu0 0.0
    %266 = vmatprep.subr.mxu0 0.0
    %267 = vmatpush1.xpose.msra.mxu0 0.0
    %268 = vmatprep.subr.mxu0 0.0
    %269 = vmatpush1.xpose.msra.mxu0 0.0
    %270 = vmatprep.subr.mxu0 0.0
    %271 = vmatpush1.xpose.msra.mxu0 0.0
    %272 = vmatprep.subr.mxu0 0.0
    %273 = vmatpush1.xpose.msra.mxu0 0.0
    %274 = vmatprep.subr.mxu0 0.0
    %275 = vmatpush1.xpose.msra.mxu0 0.0
    %276 = vmatprep.subr.mxu0 0.0
    %277 = vmatpush1.xpose.msra.mxu0 0.0
    %278 = vmatprep.subr.mxu0 0.0
    %279 = vmatpush1.xpose.msra.mxu0 0.0
    %280 = vmatprep.subr.mxu0 0.0
    %281 = vmatpush1.xpose.msra.mxu0 0.0
    %282 = vmatprep.subr.mxu0 0.0
    %283 = vmatpush1.xpose.msra.mxu0 0.0
    %284 = vmatprep.subr.mxu0 0.0
    %285 = vmatpush1.xpose.msra.mxu0 0.0
    %286 = vmatprep.subr.mxu0 0.0
    %287 = vmatpush1.xpose.msra.mxu0 0.0
    %288 = vmatprep.subr.mxu0 0.0
    %289 = vmatpush1.xpose.msra.mxu0 0.0
    %290 = vmatprep.subr.mxu0 0.0
    %291 = vmatpush1.xpose.msra.mxu0 0.0
    %292 = vmatprep.subr.mxu0 0.0
    %293 = vmatpush1.xpose.msra.mxu0 0.0
    %294 = vmatprep.subr.mxu0 0.0
    %295 = vmatpush1.xpose.msra.mxu0 0.0
    %296 = vmatprep.subr.mxu0 0.0
    %297 = vmatpush1.xpose.msra.mxu0 0.0
    %298 = vmatprep.subr.mxu0 0.0
    %299 = vmatpush1.xpose.msra.mxu0 0.0
    %300 = vmatprep.subr.mxu0 0.0
    %301 = vmatpush1.xpose.msra.mxu0 0.0
    %302 = vmatprep.subr.mxu0 0.0
    %303 = vmatpush1.xpose.msra.mxu0 0.0
    %304 = vmatprep.subr.mxu0 0.0
    %305 = vmatpush1.xpose.msra.mxu0 0.0
    %306 = vmatprep.subr.mxu0 0.0
    %307 = vmatpush1.xpose.msra.mxu0 0.0
    %308 = vmatprep.subr.mxu0 0.0
    %309 = vmatpush1.xpose.msra.mxu0 0.0
    %310 = vmatprep.subr.mxu0 0.0
    %311 = vmatpush1.xpose.msra.mxu0 0.0
    %312 = vmatprep.subr.mxu0 0.0
    %313 = vmatpush1.xpose.msra.mxu0 0.0
    %314 = vmatprep.subr.mxu0 0.0
    %315 = vmatpush1.xpose.msra.mxu0 0.0
    %316 = vmatprep.mubr.f32.mxu0 0.0
    %317 = vmatmul.mubr.f32.gmra.mrb[0].mxu0 %v244
    %v318 = vpop.f32.mrb[0].mxu0
    %v319 = vadd.f32 %v110, %v318
    %v320 = vpop.f32.mrb[0].mxu0
    %321 = vmatprep.mubr.f32.mxu0 0.0
    %322 = vmatmul.mubr.f32.gmra.mrb[0].mxu0 %v246
    %v323 = vpop.f32.mrb[0].mxu0
    %v324 = vadd.f32 %v111, %v323
    %v325 = vpop.f32.mrb[0].mxu0
    %326 = vdwg.mxu0
    %v327 = vsel %vm243, %v319, -inf
    %328 = vmax.xlane.f32.xlu0 %v327
    %v329 = vpop.xlane.xlu0 %328
    %v330 = vsel %vm243, %v324, -inf
    %331 = vmax.xlane.f32.xlu0 %v330
    %v332 = vpop.xlane.xlu0 %331
    %v333 = vsub.f32 %v319, %v329
    %v334 = vsub.f32 %v324, %v332
    %v335 = vmul.f32 %v333, 1.442695
    %v336 = vpow.pop %v335
    %v337 = vmul.f32 %v334, 1.442695
    %v338 = vpow.pop %v337
    %v339 = vsel %vm243, %v336, 0.0
    %340 = vadd.xlane.f32.xlu0 %v339
    %v341 = vpop.xlane.xlu0 %340
    %v342 = vsel %vm243, %v338, 0.0
    %343 = vadd.xlane.f32.xlu0 %v342
    %v344 = vpop.xlane.xlu0 %343
    %v345 = vrcp.pop %v341
    %v346 = vrcp.pop %v344
    %v347 = vmul.f32 %v336, %v345
    %v348 = vmul.f32 %v338, %v346
    %349 = vrot.lane.b32.xlu0 %v229, 64
    %v350 = vpop.permute.xlu0 %349
    %351 = vrot.lane.b32.xlu0 %v234, 64
    %v352 = vpop.permute.xlu0 %351
    %v356 = vsel %vm243, %v347, 0
    %v359 = vsel %vm243, %v348, 0
    %361 = vmatprep.subr.mxu0 0.0
    %362 = vmatpush1.msra.mxu0 %v350
    %363 = vmatprep.subr.mxu0 0.0
    %364 = vmatpush1.msra.mxu0 %v352
    %365 = vmatprep.subr.mxu0 0.0
    %366 = vmatpush1.msra.mxu0 0.0
    %367 = vmatprep.subr.mxu0 0.0
    %368 = vmatpush1.msra.mxu0 0.0
    %369 = vmatprep.subr.mxu0 0.0
    %370 = vmatpush1.msra.mxu0 0.0
    %371 = vmatprep.subr.mxu0 0.0
    %372 = vmatpush1.msra.mxu0 0.0
    %373 = vmatprep.subr.mxu0 0.0
    %374 = vmatpush1.msra.mxu0 0.0
    %375 = vmatprep.subr.mxu0 0.0
    %376 = vmatpush1.msra.mxu0 0.0
    %377 = vmatprep.subr.mxu0 0.0
    %378 = vmatpush1.msra.mxu0 0.0
    %379 = vmatprep.subr.mxu0 0.0
    %380 = vmatpush1.msra.mxu0 0.0
    %381 = vmatprep.subr.mxu0 0.0
    %382 = vmatpush1.msra.mxu0 0.0
    %383 = vmatprep.subr.mxu0 0.0
    %384 = vmatpush1.msra.mxu0 0.0
    %385 = vmatprep.subr.mxu0 0.0
    %386 = vmatpush1.msra.mxu0 0.0
    %387 = vmatprep.subr.mxu0 0.0
    %388 = vmatpush1.msra.mxu0 0.0
    %389 = vmatprep.subr.mxu0 0.0
    %390 = vmatpush1.msra.mxu0 0.0
    %391 = vmatprep.subr.mxu0 0.0
    %392 = vmatpush1.msra.mxu0 0.0
    %393 = vmatprep.subr.mxu0 0.0
    %394 = vmatpush1.msra.mxu0 0.0
    %395 = vmatprep.subr.mxu0 0.0
    %396 = vmatpush1.msra.mxu0 0.0
    %397 = vmatprep.subr.mxu0 0.0
    %398 = vmatpush1.msra.mxu0 0.0
    %399 = vmatprep.subr.mxu0 0.0
    %400 = vmatpush1.msra.mxu0 0.0
    %401 = vmatprep.subr.mxu0 0.0
    %402 = vmatpush1.msra.mxu0 0.0
    %403 = vmatprep.subr.mxu0 0.0
    %404 = vmatpush1.msra.mxu0 0.0
    %405 = vmatprep.subr.mxu0 0.0
    %406 = vmatpush1.msra.mxu0 0.0
    %407 = vmatprep.subr.mxu0 0.0
    %408 = vmatpush1.msra.mxu0 0.0
    %409 = vmatprep.subr.mxu0 0.0
    %410 = vmatpush1.msra.mxu0 0.0
    %411 = vmatprep.subr.mxu0 0.0
    %412 = vmatpush1.msra.mxu0 0.0
    %413 = vmatprep.subr.mxu0 0.0
    %414 = vmatpush1.msra.mxu0 0.0
    %415 = vmatprep.subr.mxu0 0.0
    %416 = vmatpush1.msra.mxu0 0.0
    %417 = vmatprep.subr.mxu0 0.0
    %418 = vmatpush1.msra.mxu0 0.0
    %419 = vmatprep.subr.mxu0 0.0
    %420 = vmatpush1.msra.mxu0 0.0
    %421 = vmatprep.subr.mxu0 0.0
    %422 = vmatpush1.msra.mxu0 0.0
    %423 = vmatprep.subr.mxu0 0.0
    %424 = vmatpush1.msra.mxu0 0.0
    %425 = vmatprep.mubr.f32.mxu0 0.0
    %426 = vmatmul.mubr.f32.gmra.mrb[0].mxu0 %v356
    %v427 = vpop.f32.mrb[0].mxu0
    %v428 = vadd.f32 0.0, %v427
    %v429 = vpop.f32.mrb[0].mxu0
    %430 = vmatprep.mubr.f32.mxu0 0.0
    %431 = vmatmul.mubr.f32.gmra.mrb[0].mxu0 %v359
    %v432 = vpop.f32.mrb[0].mxu0
    %v433 = vadd.f32 0.0, %v432
    %v434 = vpop.f32.mrb[0].mxu0
    %435 = vdwg.mxu0
    %436 = vrot.lane.b32.xlu0 %v229, 112
    %v437 = vpop.permute.xlu0 %436
    %438 = vrot.lane.b32.xlu0 %v234, 112
    %v439 = vpop.permute.xlu0 %438
    %440 = vrot.lane.b32.xlu0 %v229, 80
    %v441 = vpop.permute.xlu0 %440
    %442 = vrot.lane.b32.xlu0 %v234, 80
    %v443 = vpop.permute.xlu0 %442
    %v444 = vsel %vm243, %v437, 0
    %v446 = vsel %vm243, %v439, 0
    %v448 = vsel %vm243, %v441, 0
    %v450 = vsel %vm243, %v443, 0
    %452 = vmatprep.subr.mxu0 0.0
    %453 = vmatpush1.xpose.msra.mxu0 %v448
    %454 = vmatprep.subr.mxu0 0.0
    %455 = vmatpush1.xpose.msra.mxu0 %v450
    %456 = vmatprep.subr.mxu0 0.0
    %457 = vmatpush1.xpose.msra.mxu0 0.0
    %458 = vmatprep.subr.mxu0 0.0
    %459 = vmatpush1.xpose.msra.mxu0 0.0
    %460 = vmatprep.subr.mxu0 0.0
    %461 = vmatpush1.xpose.msra.mxu0 0.0
    %462 = vmatprep.subr.mxu0 0.0
    %463 = vmatpush1.xpose.msra.mxu0 0.0
    %464 = vmatprep.subr.mxu0 0.0
    %465 = vmatpush1.xpose.msra.mxu0 0.0
    %466 = vmatprep.subr.mxu0 0.0
    %467 = vmatpush1.xpose.msra.mxu0 0.0
    %468 = vmatprep.subr.mxu0 0.0
    %469 = vmatpush1.xpose.msra.mxu0 0.0
    %470 = vmatprep.subr.mxu0 0.0
    %471 = vmatpush1.xpose.msra.mxu0 0.0
    %472 = vmatprep.subr.mxu0 0.0
    %473 = vmatpush1.xpose.msra.mxu0 0.0
    %474 = vmatprep.subr.mxu0 0.0
    %475 = vmatpush1.xpose.msra.mxu0 0.0
    %476 = vmatprep.subr.mxu0 0.0
    %477 = vmatpush1.xpose.msra.mxu0 0.0
    %478 = vmatprep.subr.mxu0 0.0
    %479 = vmatpush1.xpose.msra.mxu0 0.0
    %480 = vmatprep.subr.mxu0 0.0
    %481 = vmatpush1.xpose.msra.mxu0 0.0
    %482 = vmatprep.subr.mxu0 0.0
    %483 = vmatpush1.xpose.msra.mxu0 0.0
    %484 = vmatprep.subr.mxu0 0.0
    %485 = vmatpush1.xpose.msra.mxu0 0.0
    %486 = vmatprep.subr.mxu0 0.0
    %487 = vmatpush1.xpose.msra.mxu0 0.0
    %488 = vmatprep.subr.mxu0 0.0
    %489 = vmatpush1.xpose.msra.mxu0 0.0
    %490 = vmatprep.subr.mxu0 0.0
    %491 = vmatpush1.xpose.msra.mxu0 0.0
    %492 = vmatprep.subr.mxu0 0.0
    %493 = vmatpush1.xpose.msra.mxu0 0.0
    %494 = vmatprep.subr.mxu0 0.0
    %495 = vmatpush1.xpose.msra.mxu0 0.0
    %496 = vmatprep.subr.mxu0 0.0
    %497 = vmatpush1.xpose.msra.mxu0 0.0
    %498 = vmatprep.subr.mxu0 0.0
    %499 = vmatpush1.xpose.msra.mxu0 0.0
    %500 = vmatprep.subr.mxu0 0.0
    %501 = vmatpush1.xpose.msra.mxu0 0.0
    %502 = vmatprep.subr.mxu0 0.0
    %503 = vmatpush1.xpose.msra.mxu0 0.0
    %504 = vmatprep.subr.mxu0 0.0
    %505 = vmatpush1.xpose.msra.mxu0 0.0
    %506 = vmatprep.subr.mxu0 0.0
    %507 = vmatpush1.xpose.msra.mxu0 0.0
    %508 = vmatprep.subr.mxu0 0.0
    %509 = vmatpush1.xpose.msra.mxu0 0.0
    %510 = vmatprep.subr.mxu0 0.0
    %511 = vmatpush1.xpose.msra.mxu0 0.0
    %512 = vmatprep.subr.mxu0 0.0
    %513 = vmatpush1.xpose.msra.mxu0 0.0
    %514 = vmatprep.subr.mxu0 0.0
    %515 = vmatpush1.xpose.msra.mxu0 0.0
    %516 = vmatprep.mubr.f32.mxu0 0.0
    %517 = vmatmul.mubr.f32.gmra.mrb[0].mxu0 %v444
    %v518 = vpop.f32.mrb[0].mxu0
    %v519 = vadd.f32 %v110, %v518
    %v520 = vpop.f32.mrb[0].mxu0
    %521 = vmatprep.mubr.f32.mxu0 0.0
    %522 = vmatmul.mubr.f32.gmra.mrb[0].mxu0 %v446
    %v523 = vpop.f32.mrb[0].mxu0
    %v524 = vadd.f32 %v111, %v523
    %v525 = vpop.f32.mrb[0].mxu0
    %526 = vdwg.mxu0
    %v527 = vsel %vm243, %v519, -inf
    %528 = vmax.xlane.f32.xlu0 %v527
    %v529 = vpop.xlane.xlu0 %528
    %v530 = vsel %vm243, %v524, -inf
    %531 = vmax.xlane.f32.xlu0 %v530
    %v532 = vpop.xlane.xlu0 %531
    %v533 = vsub.f32 %v519, %v529
    %v534 = vsub.f32 %v524, %v532
    %v535 = vmul.f32 %v533, 1.442695
    %v536 = vpow.pop %v535
    %v537 = vmul.f32 %v534, 1.442695
    %v538 = vpow.pop %v537
    %v539 = vsel %vm243, %v536, 0.0
    %540 = vadd.xlane.f32.xlu0 %v539
    %v541 = vpop.xlane.xlu0 %540
    %v542 = vsel %vm243, %v538, 0.0
    %543 = vadd.xlane.f32.xlu0 %v542
    %v544 = vpop.xlane.xlu0 %543
    %v545 = vrcp.pop %v541
    %v546 = vrcp.pop %v544
    %v547 = vmul.f32 %v536, %v545
    %v548 = vmul.f32 %v538, %v546
    %549 = vrot.lane.b32.xlu0 %v229, 48
    %v550 = vpop.permute.xlu0 %549
    %551 = vrot.lane.b32.xlu0 %v234, 48
    %v552 = vpop.permute.xlu0 %551
    %v556 = vsel %vm243, %v547, 0
    %v559 = vsel %vm243, %v548, 0
    %561 = vmatprep.subr.mxu0 0.0
    %562 = vmatpush1.msra.mxu0 %v550
    %563 = vmatprep.subr.mxu0 0.0
    %564 = vmatpush1.msra.mxu0 %v552
    %565 = vmatprep.subr.mxu0 0.0
    %566 = vmatpush1.msra.mxu0 0.0
    %567 = vmatprep.subr.mxu0 0.0
    %568 = vmatpush1.msra.mxu0 0.0
    %569 = vmatprep.subr.mxu0 0.0
    %570 = vmatpush1.msra.mxu0 0.0
    %571 = vmatprep.subr.mxu0 0.0
    %572 = vmatpush1.msra.mxu0 0.0
    %573 = vmatprep.subr.mxu0 0.0
    %574 = vmatpush1.msra.mxu0 0.0
    %575 = vmatprep.subr.mxu0 0.0
    %576 = vmatpush1.msra.mxu0 0.0
    %577 = vmatprep.subr.mxu0 0.0
    %578 = vmatpush1.msra.mxu0 0.0
    %579 = vmatprep.subr.mxu0 0.0
    %580 = vmatpush1.msra.mxu0 0.0
    %581 = vmatprep.subr.mxu0 0.0
    %582 = vmatpush1.msra.mxu0 0.0
    %583 = vmatprep.subr.mxu0 0.0
    %584 = vmatpush1.msra.mxu0 0.0
    %585 = vmatprep.subr.mxu0 0.0
    %586 = vmatpush1.msra.mxu0 0.0
    %587 = vmatprep.subr.mxu0 0.0
    %588 = vmatpush1.msra.mxu0 0.0
    %589 = vmatprep.subr.mxu0 0.0
    %590 = vmatpush1.msra.mxu0 0.0
    %591 = vmatprep.subr.mxu0 0.0
    %592 = vmatpush1.msra.mxu0 0.0
    %593 = vmatprep.subr.mxu0 0.0
    %594 = vmatpush1.msra.mxu0 0.0
    %595 = vmatprep.subr.mxu0 0.0
    %596 = vmatpush1.msra.mxu0 0.0
    %597 = vmatprep.subr.mxu0 0.0
    %598 = vmatpush1.msra.mxu0 0.0
    %599 = vmatprep.subr.mxu0 0.0
    %600 = vmatpush1.msra.mxu0 0.0
    %601 = vmatprep.subr.mxu0 0.0
    %602 = vmatpush1.msra.mxu0 0.0
    %603 = vmatprep.subr.mxu0 0.0
    %604 = vmatpush1.msra.mxu0 0.0
    %605 = vmatprep.subr.mxu0 0.0
    %606 = vmatpush1.msra.mxu0 0.0
    %607 = vmatprep.subr.mxu0 0.0
    %608 = vmatpush1.msra.mxu0 0.0
    %609 = vmatprep.subr.mxu0 0.0
    %610 = vmatpush1.msra.mxu0 0.0
    %611 = vmatprep.subr.mxu0 0.0
    %612 = vmatpush1.msra.mxu0 0.0
    %613 = vmatprep.subr.mxu0 0.0
    %614 = vmatpush1.msra.mxu0 0.0
    %615 = vmatprep.subr.mxu0 0.0
    %616 = vmatpush1.msra.mxu0 0.0
    %617 = vmatprep.subr.mxu0 0.0
    %618 = vmatpush1.msra.mxu0 0.0
    %619 = vmatprep.subr.mxu0 0.0
    %620 = vmatpush1.msra.mxu0 0.0
    %621 = vmatprep.subr.mxu0 0.0
    %622 = vmatpush1.msra.mxu0 0.0
    %623 = vmatprep.subr.mxu0 0.0
    %624 = vmatpush1.msra.mxu0 0.0
    %625 = vmatprep.mubr.f32.mxu0 0.0
    %626 = vmatmul.mubr.f32.gmra.mrb[0].mxu0 %v556
    %v627 = vpop.f32.mrb[0].mxu0
    %v628 = vadd.f32 0.0, %v627
    %v629 = vpop.f32.mrb[0].mxu0
    %630 = vmatprep.mubr.f32.mxu0 0.0
    %631 = vmatmul.mubr.f32.gmra.mrb[0].mxu0 %v559
    %v632 = vpop.f32.mrb[0].mxu0
    %v633 = vadd.f32 0.0, %v632
    %v634 = vpop.f32.mrb[0].mxu0
    %635 = vdwg.mxu0
    %638 = vrot.lane.b32.xlu0 %v628, 16
    %v639 = vpop.permute.xlu0 %638
    %640 = vrot.lane.b32.xlu0 %v633, 16
    %v641 = vpop.permute.xlu0 %640
    %v644 = vsel %vm243, %v428, %v639
    %v645 = vsel %vm243, %v433, %v641
    %v647 = vsel %vm112, %v644, 0
    %v650 = vsel %vm112, %v645, 0
    %652 = vmatprep.subr.mxu0 0.0
    %653 = vmatpush1.msra.mxu0 %v74
    %654 = vmatprep.subr.mxu0 0.0
    %655 = vmatpush1.msra.mxu0 %v75
    %656 = vmatprep.subr.mxu0 0.0
    %657 = vmatpush1.msra.mxu0 %v76
    %658 = vmatprep.subr.mxu0 0.0
    %659 = vmatpush1.msra.mxu0 %v77
    %660 = vmatprep.subr.mxu0 0.0
    %661 = vmatpush1.msra.mxu0 0.0
    %662 = vmatprep.subr.mxu0 0.0
    %663 = vmatpush1.msra.mxu0 0.0
    %664 = vmatprep.subr.mxu0 0.0
    %665 = vmatpush1.msra.mxu0 0.0
    %666 = vmatprep.subr.mxu0 0.0
    %667 = vmatpush1.msra.mxu0 0.0
    %668 = vmatprep.subr.mxu0 0.0
    %669 = vmatpush1.msra.mxu0 0.0
    %670 = vmatprep.subr.mxu0 0.0
    %671 = vmatpush1.msra.mxu0 0.0
    %672 = vmatprep.subr.mxu0 0.0
    %673 = vmatpush1.msra.mxu0 0.0
    %674 = vmatprep.subr.mxu0 0.0
    %675 = vmatpush1.msra.mxu0 0.0
    %676 = vmatprep.subr.mxu0 0.0
    %677 = vmatpush1.msra.mxu0 0.0
    %678 = vmatprep.subr.mxu0 0.0
    %679 = vmatpush1.msra.mxu0 0.0
    %680 = vmatprep.subr.mxu0 0.0
    %681 = vmatpush1.msra.mxu0 0.0
    %682 = vmatprep.subr.mxu0 0.0
    %683 = vmatpush1.msra.mxu0 0.0
    %684 = vmatprep.subr.mxu0 0.0
    %685 = vmatpush1.msra.mxu0 0.0
    %686 = vmatprep.subr.mxu0 0.0
    %687 = vmatpush1.msra.mxu0 0.0
    %688 = vmatprep.subr.mxu0 0.0
    %689 = vmatpush1.msra.mxu0 0.0
    %690 = vmatprep.subr.mxu0 0.0
    %691 = vmatpush1.msra.mxu0 0.0
    %692 = vmatprep.subr.mxu0 0.0
    %693 = vmatpush1.msra.mxu0 0.0
    %694 = vmatprep.subr.mxu0 0.0
    %695 = vmatpush1.msra.mxu0 0.0
    %696 = vmatprep.subr.mxu0 0.0
    %697 = vmatpush1.msra.mxu0 0.0
    %698 = vmatprep.subr.mxu0 0.0
    %699 = vmatpush1.msra.mxu0 0.0
    %700 = vmatprep.subr.mxu0 0.0
    %701 = vmatpush1.msra.mxu0 0.0
    %702 = vmatprep.subr.mxu0 0.0
    %703 = vmatpush1.msra.mxu0 0.0
    %704 = vmatprep.subr.mxu0 0.0
    %705 = vmatpush1.msra.mxu0 0.0
    %706 = vmatprep.subr.mxu0 0.0
    %707 = vmatpush1.msra.mxu0 0.0
    %708 = vmatprep.subr.mxu0 0.0
    %709 = vmatpush1.msra.mxu0 0.0
    %710 = vmatprep.subr.mxu0 0.0
    %711 = vmatpush1.msra.mxu0 0.0
    %712 = vmatprep.subr.mxu0 0.0
    %713 = vmatpush1.msra.mxu0 0.0
    %714 = vmatprep.subr.mxu0 0.0
    %715 = vmatpush1.msra.mxu0 0.0
    %716 = vmatprep.mubr.f32.mxu0 0.0
    %717 = vmatmul.mubr.f32.gmra.mrb[0].mxu0 %v647
    %v718 = vpop.f32.mrb[0].mxu0
    %v719 = vadd.f32 0.0, %v718
    %v720 = vpop.f32.mrb[0].mxu0
    %721 = vmatprep.mubr.f32.mxu0 0.0
    %722 = vmatmul.mubr.f32.gmra.mrb[0].mxu0 %v650
    %v723 = vpop.f32.mrb[0].mxu0
    %v724 = vadd.f32 0.0, %v723
    %v725 = vpop.f32.mrb[0].mxu0
    %726 = vdwg.mxu0
    %v727 = vadd.f32 %v56, %v719
    %v728 = vadd.f32 %v57, %v724
    %v729 = vlaneseq
    %v730 = vshrl.u32 %v729, 7
    %v731 = vsub.s32 0, %v730
    %v732 = vrot.slane %v65, %v731
    %v733 = vadd.f32 %v727, %v732
    %v734 = vadd.f32 %v728, %v732
    %v735 = vsel %vm112, %v733, 0.0
    %736 = vadd.xlane.f32.xlu0 %v735
    %v737 = vpop.xlane.xlu0 %736
    %v738 = vsel %vm112, %v734, 0.0
    %739 = vadd.xlane.f32.xlu0 %v738
    %v740 = vpop.xlane.xlu0 %739
    %v741 = vmul.f32 %v737, %v119
    %v742 = vmul.f32 %v740, %v119
    %v743 = vsub.f32 %v733, %v741
    %v744 = vsub.f32 %v734, %v742
    %v745 = vmul.f32 %v743, %v743
    %v746 = vmul.f32 %v744, %v744
    %v747 = vsel %vm112, %v745, 0.0
    %748 = vadd.xlane.f32.xlu0 %v747
    %v749 = vpop.xlane.xlu0 %748
    %v750 = vsel %vm112, %v746, 0.0
    %751 = vadd.xlane.f32.xlu0 %v750
    %v752 = vpop.xlane.xlu0 %751
    %v753 = vmul.f32 %v749, %v119
    %v754 = vmul.f32 %v752, %v119
    %v755 = vadd.f32 %v753, 1e-05
    %v756 = vadd.f32 %v754, 1e-05
    %v757 = vrsqrt.pop %v755
    %v758 = vrsqrt.pop %v756
    %v759 = vmul.f32 %v743, %v757
    %v760 = vmul.f32 %v744, %v758
    %v761 = vlaneseq
    %v762 = vshrl.u32 %v761, 7
    %v763 = vsub.s32 0, %v762
    %v764 = vrot.slane %v60, %v763
    %v765 = vmul.f32 %v759, %v764
    %v766 = vmul.f32 %v760, %v764
    %v767 = vlaneseq
    %v768 = vshrl.u32 %v767, 7
    %v769 = vsub.s32 0, %v768
    %v770 = vrot.slane %v61, %v769
    %v771 = vadd.f32 %v765, %v770
    %v772 = vadd.f32 %v766, %v770
    %v773 = vlaneseq
    %v774 = vshrl.u32 %v773, 7
    %v775 = vsub.s32 0, %v774
    %v776 = vrot.slane %v66, %v775
    %v778 = vsel %vm112, %v771, 0
    %v781 = vsel %vm112, %v772, 0
    %783 = vmatprep.subr.mxu0 0.0
    %784 = vmatpush1.msra.mxu0 %v78
    %785 = vmatprep.subr.mxu0 0.0
    %786 = vmatpush1.msra.mxu0 %v79
    %787 = vmatprep.subr.mxu0 0.0
    %788 = vmatpush1.msra.mxu0 %v80
    %789 = vmatprep.subr.mxu0 0.0
    %790 = vmatpush1.msra.mxu0 %v81
    %791 = vmatprep.subr.mxu0 0.0
    %792 = vmatpush1.msra.mxu0 0.0
    %793 = vmatprep.subr.mxu0 0.0
    %794 = vmatpush1.msra.mxu0 0.0
    %795 = vmatprep.subr.mxu0 0.0
    %796 = vmatpush1.msra.mxu0 0.0
    %797 = vmatprep.subr.mxu0 0.0
    %798 = vmatpush1.msra.mxu0 0.0
    %799 = vmatprep.subr.mxu0 0.0
    %800 = vmatpush1.msra.mxu0 0.0
    %801 = vmatprep.subr.mxu0 0.0
    %802 = vmatpush1.msra.mxu0 0.0
    %803 = vmatprep.subr.mxu0 0.0
    %804 = vmatpush1.msra.mxu0 0.0
    %805 = vmatprep.subr.mxu0 0.0
    %806 = vmatpush1.msra.mxu0 0.0
    %807 = vmatprep.subr.mxu0 0.0
    %808 = vmatpush1.msra.mxu0 0.0
    %809 = vmatprep.subr.mxu0 0.0
    %810 = vmatpush1.msra.mxu0 0.0
    %811 = vmatprep.subr.mxu0 0.0
    %812 = vmatpush1.msra.mxu0 0.0
    %813 = vmatprep.subr.mxu0 0.0
    %814 = vmatpush1.msra.mxu0 0.0
    %815 = vmatprep.subr.mxu0 0.0
    %816 = vmatpush1.msra.mxu0 0.0
    %817 = vmatprep.subr.mxu0 0.0
    %818 = vmatpush1.msra.mxu0 0.0
    %819 = vmatprep.subr.mxu0 0.0
    %820 = vmatpush1.msra.mxu0 0.0
    %821 = vmatprep.subr.mxu0 0.0
    %822 = vmatpush1.msra.mxu0 0.0
    %823 = vmatprep.subr.mxu0 0.0
    %824 = vmatpush1.msra.mxu0 0.0
    %825 = vmatprep.subr.mxu0 0.0
    %826 = vmatpush1.msra.mxu0 0.0
    %827 = vmatprep.subr.mxu0 0.0
    %828 = vmatpush1.msra.mxu0 0.0
    %829 = vmatprep.subr.mxu0 0.0
    %830 = vmatpush1.msra.mxu0 0.0
    %831 = vmatprep.subr.mxu0 0.0
    %832 = vmatpush1.msra.mxu0 0.0
    %833 = vmatprep.subr.mxu0 0.0
    %834 = vmatpush1.msra.mxu0 0.0
    %835 = vmatprep.subr.mxu0 0.0
    %836 = vmatpush1.msra.mxu0 0.0
    %837 = vmatprep.subr.mxu0 0.0
    %838 = vmatpush1.msra.mxu0 0.0
    %839 = vmatprep.subr.mxu0 0.0
    %840 = vmatpush1.msra.mxu0 0.0
    %841 = vmatprep.subr.mxu0 0.0
    %842 = vmatpush1.msra.mxu0 0.0
    %843 = vmatprep.subr.mxu0 0.0
    %844 = vmatpush1.msra.mxu0 0.0
    %845 = vmatprep.subr.mxu0 0.0
    %846 = vmatpush1.msra.mxu0 0.0
    %847 = vmatprep.mubr.f32.mxu0 0.0
    %848 = vmatmul.mubr.f32.gmra.mrb[0].mxu0 %v778
    %v849 = vpop.f32.mrb[0].mxu0
    %v850 = vadd.f32 %v776, %v849
    %v851 = vpop.f32.mrb[0].mxu0
    %852 = vmatprep.mubr.f32.mxu0 0.0
    %853 = vmatmul.mubr.f32.gmra.mrb[0].mxu0 %v781
    %v854 = vpop.f32.mrb[0].mxu0
    %v855 = vadd.f32 %v776, %v854
    %v856 = vpop.f32.mrb[0].mxu0
    %857 = vdwg.mxu0
    %859 = vrot.lane.b32.xlu0 %v776, 96
    %v860 = vpop.permute.xlu0 %859
    %v863 = vsel %vm112, %v56, 0
    %v866 = vsel %vm112, %v57, 0
    %868 = vmatprep.subr.mxu0 0.0
    %869 = vmatpush1.msra.mxu0 %v82
    %870 = vmatprep.subr.mxu0 0.0
    %871 = vmatpush1.msra.mxu0 %v83
    %872 = vmatprep.subr.mxu0 0.0
    %873 = vmatpush1.msra.mxu0 %v84
    %874 = vmatprep.subr.mxu0 0.0
    %875 = vmatpush1.msra.mxu0 %v85
    %876 = vmatprep.subr.mxu0 0.0
    %877 = vmatpush1.msra.mxu0 0.0
    %878 = vmatprep.subr.mxu0 0.0
    %879 = vmatpush1.msra.mxu0 0.0
    %880 = vmatprep.subr.mxu0 0.0
    %881 = vmatpush1.msra.mxu0 0.0
    %882 = vmatprep.subr.mxu0 0.0
    %883 = vmatpush1.msra.mxu0 0.0
    %884 = vmatprep.subr.mxu0 0.0
    %885 = vmatpush1.msra.mxu0 0.0
    %886 = vmatprep.subr.mxu0 0.0
    %887 = vmatpush1.msra.mxu0 0.0
    %888 = vmatprep.subr.mxu0 0.0
    %889 = vmatpush1.msra.mxu0 0.0
    %890 = vmatprep.subr.mxu0 0.0
    %891 = vmatpush1.msra.mxu0 0.0
    %892 = vmatprep.subr.mxu0 0.0
    %893 = vmatpush1.msra.mxu0 0.0
    %894 = vmatprep.subr.mxu0 0.0
    %895 = vmatpush1.msra.mxu0 0.0
    %896 = vmatprep.subr.mxu0 0.0
    %897 = vmatpush1.msra.mxu0 0.0
    %898 = vmatprep.subr.mxu0 0.0
    %899 = vmatpush1.msra.mxu0 0.0
    %900 = vmatprep.subr.mxu0 0.0
    %901 = vmatpush1.msra.mxu0 0.0
    %902 = vmatprep.subr.mxu0 0.0
    %903 = vmatpush1.msra.mxu0 0.0
    %904 = vmatprep.subr.mxu0 0.0
    %905 = vmatpush1.msra.mxu0 0.0
    %906 = vmatprep.subr.mxu0 0.0
    %907 = vmatpush1.msra.mxu0 0.0
    %908 = vmatprep.subr.mxu0 0.0
    %909 = vmatpush1.msra.mxu0 0.0
    %910 = vmatprep.subr.mxu0 0.0
    %911 = vmatpush1.msra.mxu0 0.0
    %912 = vmatprep.subr.mxu0 0.0
    %913 = vmatpush1.msra.mxu0 0.0
    %914 = vmatprep.subr.mxu0 0.0
    %915 = vmatpush1.msra.mxu0 0.0
    %916 = vmatprep.subr.mxu0 0.0
    %917 = vmatpush1.msra.mxu0 0.0
    %918 = vmatprep.subr.mxu0 0.0
    %919 = vmatpush1.msra.mxu0 0.0
    %920 = vmatprep.subr.mxu0 0.0
    %921 = vmatpush1.msra.mxu0 0.0
    %922 = vmatprep.subr.mxu0 0.0
    %923 = vmatpush1.msra.mxu0 0.0
    %924 = vmatprep.subr.mxu0 0.0
    %925 = vmatpush1.msra.mxu0 0.0
    %926 = vmatprep.subr.mxu0 0.0
    %927 = vmatpush1.msra.mxu0 0.0
    %928 = vmatprep.subr.mxu0 0.0
    %929 = vmatpush1.msra.mxu0 0.0
    %930 = vmatprep.subr.mxu0 0.0
    %931 = vmatpush1.msra.mxu0 0.0
    %932 = vmatprep.mubr.f32.mxu0 0.0
    %933 = vmatmul.mubr.f32.gmra.mrb[0].mxu0 %v863
    %v934 = vpop.f32.mrb[0].mxu0
    %v935 = vadd.f32 %v860, %v934
    %v936 = vpop.f32.mrb[0].mxu0
    %937 = vmatprep.mubr.f32.mxu0 0.0
    %938 = vmatmul.mubr.f32.gmra.mrb[0].mxu0 %v866
    %v939 = vpop.f32.mrb[0].mxu0
    %v940 = vadd.f32 %v860, %v939
    %v941 = vpop.f32.mrb[0].mxu0
    %942 = vdwg.mxu0
    %v944 = vsel %vm243, %v850, 0
    %v947 = vsel %vm243, %v855, 0
    %v950 = vsel %vm243, %v935, 0
    %v953 = vsel %vm243, %v940, 0
    %955 = vmatprep.subr.mxu0 0.0
    %956 = vmatpush1.xpose.msra.mxu0 %v950
    %957 = vmatprep.subr.mxu0 0.0
    %958 = vmatpush1.xpose.msra.mxu0 %v953
    %959 = vmatprep.subr.mxu0 0.0
    %960 = vmatpush1.xpose.msra.mxu0 0.0
    %961 = vmatprep.subr.mxu0 0.0
    %962 = vmatpush1.xpose.msra.mxu0 0.0
    %963 = vmatprep.subr.mxu0 0.0
    %964 = vmatpush1.xpose.msra.mxu0 0.0
    %965 = vmatprep.subr.mxu0 0.0
    %966 = vmatpush1.xpose.msra.mxu0 0.0
    %967 = vmatprep.subr.mxu0 0.0
    %968 = vmatpush1.xpose.msra.mxu0 0.0
    %969 = vmatprep.subr.mxu0 0.0
    %970 = vmatpush1.xpose.msra.mxu0 0.0
    %971 = vmatprep.subr.mxu0 0.0
    %972 = vmatpush1.xpose.msra.mxu0 0.0
    %973 = vmatprep.subr.mxu0 0.0
    %974 = vmatpush1.xpose.msra.mxu0 0.0
    %975 = vmatprep.subr.mxu0 0.0
    %976 = vmatpush1.xpose.msra.mxu0 0.0
    %977 = vmatprep.subr.mxu0 0.0
    %978 = vmatpush1.xpose.msra.mxu0 0.0
    %979 = vmatprep.subr.mxu0 0.0
    %980 = vmatpush1.xpose.msra.mxu0 0.0
    %981 = vmatprep.subr.mxu0 0.0
    %982 = vmatpush1.xpose.msra.mxu0 0.0
    %983 = vmatprep.subr.mxu0 0.0
    %984 = vmatpush1.xpose.msra.mxu0 0.0
    %985 = vmatprep.subr.mxu0 0.0
    %986 = vmatpush1.xpose.msra.mxu0 0.0
    %987 = vmatprep.subr.mxu0 0.0
    %988 = vmatpush1.xpose.msra.mxu0 0.0
    %989 = vmatprep.subr.mxu0 0.0
    %990 = vmatpush1.xpose.msra.mxu0 0.0
    %991 = vmatprep.subr.mxu0 0.0
    %992 = vmatpush1.xpose.msra.mxu0 0.0
    %993 = vmatprep.subr.mxu0 0.0
    %994 = vmatpush1.xpose.msra.mxu0 0.0
    %995 = vmatprep.subr.mxu0 0.0
    %996 = vmatpush1.xpose.msra.mxu0 0.0
    %997 = vmatprep.subr.mxu0 0.0
    %998 = vmatpush1.xpose.msra.mxu0 0.0
    %999 = vmatprep.subr.mxu0 0.0
    %1000 = vmatpush1.xpose.msra.mxu0 0.0
    %1001 = vmatprep.subr.mxu0 0.0
    %1002 = vmatpush1.xpose.msra.mxu0 0.0
    %1003 = vmatprep.subr.mxu0 0.0
    %1004 = vmatpush1.xpose.msra.mxu0 0.0
    %1005 = vmatprep.subr.mxu0 0.0
    %1006 = vmatpush1.xpose.msra.mxu0 0.0
    %1007 = vmatprep.subr.mxu0 0.0
    %1008 = vmatpush1.xpose.msra.mxu0 0.0
    %1009 = vmatprep.subr.mxu0 0.0
    %1010 = vmatpush1.xpose.msra.mxu0 0.0
    %1011 = vmatprep.subr.mxu0 0.0
    %1012 = vmatpush1.xpose.msra.mxu0 0.0
    %1013 = vmatprep.subr.mxu0 0.0
    %1014 = vmatpush1.xpose.msra.mxu0 0.0
    %1015 = vmatprep.subr.mxu0 0.0
    %1016 = vmatpush1.xpose.msra.mxu0 0.0
    %1017 = vmatprep.subr.mxu0 0.0
    %1018 = vmatpush1.xpose.msra.mxu0 0.0
    %1019 = vmatprep.mubr.f32.mxu0 0.0
    %1020 = vmatmul.mubr.f32.gmra.mrb[0].mxu0 %v944
    %v1021 = vpop.f32.mrb[0].mxu0
    %v1022 = vadd.f32 %v110, %v1021
    %v1023 = vpop.f32.mrb[0].mxu0
    %1024 = vmatprep.mubr.f32.mxu0 0.0
    %1025 = vmatmul.mubr.f32.gmra.mrb[0].mxu0 %v947
    %v1026 = vpop.f32.mrb[0].mxu0
    %v1027 = vadd.f32 %v111, %v1026
    %v1028 = vpop.f32.mrb[0].mxu0
    %1029 = vdwg.mxu0
    %v1030 = vsel %vm243, %v1022, -inf
    %1031 = vmax.xlane.f32.xlu0 %v1030
    %v1032 = vpop.xlane.xlu0 %1031
    %v1033 = vsel %vm243, %v1027, -inf
    %1034 = vmax.xlane.f32.xlu0 %v1033
    %v1035 = vpop.xlane.xlu0 %1034
    %v1036 = vsub.f32 %v1022, %v1032
    %v1037 = vsub.f32 %v1027, %v1035
    %v1038 = vmul.f32 %v1036, 1.442695
    %v1039 = vpow.pop %v1038
    %v1040 = vmul.f32 %v1037, 1.442695
    %v1041 = vpow.pop %v1040
    %v1042 = vsel %vm243, %v1039, 0.0
    %1043 = vadd.xlane.f32.xlu0 %v1042
    %v1044 = vpop.xlane.xlu0 %1043
    %v1045 = vsel %vm243, %v1041, 0.0
    %1046 = vadd.xlane.f32.xlu0 %v1045
    %v1047 = vpop.xlane.xlu0 %1046
    %v1048 = vrcp.pop %v1044
    %v1049 = vrcp.pop %v1047
    %v1050 = vmul.f32 %v1039, %v1048
    %v1051 = vmul.f32 %v1041, %v1049
    %1052 = vrot.lane.b32.xlu0 %v935, 96
    %v1053 = vpop.permute.xlu0 %1052
    %1054 = vrot.lane.b32.xlu0 %v940, 96
    %v1055 = vpop.permute.xlu0 %1054
    %v1059 = vsel %vm243, %v1050, 0
    %v1062 = vsel %vm243, %v1051, 0
    %1064 = vmatprep.subr.mxu0 0.0
    %1065 = vmatpush1.msra.mxu0 %v1053
    %1066 = vmatprep.subr.mxu0 0.0
    %1067 = vmatpush1.msra.mxu0 %v1055
    %1068 = vmatprep.subr.mxu0 0.0
    %1069 = vmatpush1.msra.mxu0 0.0
    %1070 = vmatprep.subr.mxu0 0.0
    %1071 = vmatpush1.msra.mxu0 0.0
    %1072 = vmatprep.subr.mxu0 0.0
    %1073 = vmatpush1.msra.mxu0 0.0
    %1074 = vmatprep.subr.mxu0 0.0
    %1075 = vmatpush1.msra.mxu0 0.0
    %1076 = vmatprep.subr.mxu0 0.0
    %1077 = vmatpush1.msra.mxu0 0.0
    %1078 = vmatprep.subr.mxu0 0.0
    %1079 = vmatpush1.msra.mxu0 0.0
    %1080 = vmatprep.subr.mxu0 0.0
    %1081 = vmatpush1.msra.mxu0 0.0
    %1082 = vmatprep.subr.mxu0 0.0
    %1083 = vmatpush1.msra.mxu0 0.0
    %1084 = vmatprep.subr.mxu0 0.0
    %1085 = vmatpush1.msra.mxu0 0.0
    %1086 = vmatprep.subr.mxu0 0.0
    %1087 = vmatpush1.msra.mxu0 0.0
    %1088 = vmatprep.subr.mxu0 0.0
    %1089 = vmatpush1.msra.mxu0 0.0
    %1090 = vmatprep.subr.mxu0 0.0
    %1091 = vmatpush1.msra.mxu0 0.0
    %1092 = vmatprep.subr.mxu0 0.0
    %1093 = vmatpush1.msra.mxu0 0.0
    %1094 = vmatprep.subr.mxu0 0.0
    %1095 = vmatpush1.msra.mxu0 0.0
    %1096 = vmatprep.subr.mxu0 0.0
    %1097 = vmatpush1.msra.mxu0 0.0
    %1098 = vmatprep.subr.mxu0 0.0
    %1099 = vmatpush1.msra.mxu0 0.0
    %1100 = vmatprep.subr.mxu0 0.0
    %1101 = vmatpush1.msra.mxu0 0.0
    %1102 = vmatprep.subr.mxu0 0.0
    %1103 = vmatpush1.msra.mxu0 0.0
    %1104 = vmatprep.subr.mxu0 0.0
    %1105 = vmatpush1.msra.mxu0 0.0
    %1106 = vmatprep.subr.mxu0 0.0
    %1107 = vmatpush1.msra.mxu0 0.0
    %1108 = vmatprep.subr.mxu0 0.0
    %1109 = vmatpush1.msra.mxu0 0.0
    %1110 = vmatprep.subr.mxu0 0.0
    %1111 = vmatpush1.msra.mxu0 0.0
    %1112 = vmatprep.subr.mxu0 0.0
    %1113 = vmatpush1.msra.mxu0 0.0
    %1114 = vmatprep.subr.mxu0 0.0
    %1115 = vmatpush1.msra.mxu0 0.0
    %1116 = vmatprep.subr.mxu0 0.0
    %1117 = vmatpush1.msra.mxu0 0.0
    %1118 = vmatprep.subr.mxu0 0.0
    %1119 = vmatpush1.msra.mxu0 0.0
    %1120 = vmatprep.subr.mxu0 0.0
    %1121 = vmatpush1.msra.mxu0 0.0
    %1122 = vmatprep.subr.mxu0 0.0
    %1123 = vmatpush1.msra.mxu0 0.0
    %1124 = vmatprep.subr.mxu0 0.0
    %1125 = vmatpush1.msra.mxu0 0.0
    %1126 = vmatprep.subr.mxu0 0.0
    %1127 = vmatpush1.msra.mxu0 0.0
    %1128 = vmatprep.mubr.f32.mxu0 0.0
    %1129 = vmatmul.mubr.f32.gmra.mrb[0].mxu0 %v1059
    %v1130 = vpop.f32.mrb[0].mxu0
    %v1131 = vadd.f32 0.0, %v1130
    %v1132 = vpop.f32.mrb[0].mxu0
    %1133 = vmatprep.mubr.f32.mxu0 0.0
    %1134 = vmatmul.mubr.f32.gmra.mrb[0].mxu0 %v1062
    %v1135 = vpop.f32.mrb[0].mxu0
    %v1136 = vadd.f32 0.0, %v1135
    %v1137 = vpop.f32.mrb[0].mxu0
    %1138 = vdwg.mxu0
    %1139 = vrot.lane.b32.xlu0 %v850, 112
    %v1140 = vpop.permute.xlu0 %1139
    %1141 = vrot.lane.b32.xlu0 %v855, 112
    %v1142 = vpop.permute.xlu0 %1141
    %1143 = vrot.lane.b32.xlu0 %v935, 112
    %v1144 = vpop.permute.xlu0 %1143
    %1145 = vrot.lane.b32.xlu0 %v940, 112
    %v1146 = vpop.permute.xlu0 %1145
    %v1147 = vsel %vm243, %v1140, 0
    %v1149 = vsel %vm243, %v1142, 0
    %v1151 = vsel %vm243, %v1144, 0
    %v1153 = vsel %vm243, %v1146, 0
    %1155 = vmatprep.subr.mxu0 0.0
    %1156 = vmatpush1.xpose.msra.mxu0 %v1151
    %1157 = vmatprep.subr.mxu0 0.0
    %1158 = vmatpush1.xpose.msra.mxu0 %v1153
    %1159 = vmatprep.subr.mxu0 0.0
    %1160 = vmatpush1.xpose.msra.mxu0 0.0
    %1161 = vmatprep.subr.mxu0 0.0
    %1162 = vmatpush1.xpose.msra.mxu0 0.0
    %1163 = vmatprep.subr.mxu0 0.0
    %1164 = vmatpush1.xpose.msra.mxu0 0.0
    %1165 = vmatprep.subr.mxu0 0.0
    %1166 = vmatpush1.xpose.msra.mxu0 0.0
    %1167 = vmatprep.subr.mxu0 0.0
    %1168 = vmatpush1.xpose.msra.mxu0 0.0
    %1169 = vmatprep.subr.mxu0 0.0
    %1170 = vmatpush1.xpose.msra.mxu0 0.0
    %1171 = vmatprep.subr.mxu0 0.0
    %1172 = vmatpush1.xpose.msra.mxu0 0.0
    %1173 = vmatprep.subr.mxu0 0.0
    %1174 = vmatpush1.xpose.msra.mxu0 0.0
    %1175 = vmatprep.subr.mxu0 0.0
    %1176 = vmatpush1.xpose.msra.mxu0 0.0
    %1177 = vmatprep.subr.mxu0 0.0
    %1178 = vmatpush1.xpose.msra.mxu0 0.0
    %1179 = vmatprep.subr.mxu0 0.0
    %1180 = vmatpush1.xpose.msra.mxu0 0.0
    %1181 = vmatprep.subr.mxu0 0.0
    %1182 = vmatpush1.xpose.msra.mxu0 0.0
    %1183 = vmatprep.subr.mxu0 0.0
    %1184 = vmatpush1.xpose.msra.mxu0 0.0
    %1185 = vmatprep.subr.mxu0 0.0
    %1186 = vmatpush1.xpose.msra.mxu0 0.0
    %1187 = vmatprep.subr.mxu0 0.0
    %1188 = vmatpush1.xpose.msra.mxu0 0.0
    %1189 = vmatprep.subr.mxu0 0.0
    %1190 = vmatpush1.xpose.msra.mxu0 0.0
    %1191 = vmatprep.subr.mxu0 0.0
    %1192 = vmatpush1.xpose.msra.mxu0 0.0
    %1193 = vmatprep.subr.mxu0 0.0
    %1194 = vmatpush1.xpose.msra.mxu0 0.0
    %1195 = vmatprep.subr.mxu0 0.0
    %1196 = vmatpush1.xpose.msra.mxu0 0.0
    %1197 = vmatprep.subr.mxu0 0.0
    %1198 = vmatpush1.xpose.msra.mxu0 0.0
    %1199 = vmatprep.subr.mxu0 0.0
    %1200 = vmatpush1.xpose.msra.mxu0 0.0
    %1201 = vmatprep.subr.mxu0 0.0
    %1202 = vmatpush1.xpose.msra.mxu0 0.0
    %1203 = vmatprep.subr.mxu0 0.0
    %1204 = vmatpush1.xpose.msra.mxu0 0.0
    %1205 = vmatprep.subr.mxu0 0.0
    %1206 = vmatpush1.xpose.msra.mxu0 0.0
    %1207 = vmatprep.subr.mxu0 0.0
    %1208 = vmatpush1.xpose.msra.mxu0 0.0
    %1209 = vmatprep.subr.mxu0 0.0
    %1210 = vmatpush1.xpose.msra.mxu0 0.0
    %1211 = vmatprep.subr.mxu0 0.0
    %1212 = vmatpush1.xpose.msra.mxu0 0.0
    %1213 = vmatprep.subr.mxu0 0.0
    %1214 = vmatpush1.xpose.msra.mxu0 0.0
    %1215 = vmatprep.subr.mxu0 0.0
    %1216 = vmatpush1.xpose.msra.mxu0 0.0
    %1217 = vmatprep.subr.mxu0 0.0
    %1218 = vmatpush1.xpose.msra.mxu0 0.0
    %1219 = vmatprep.mubr.f32.mxu0 0.0
    %1220 = vmatmul.mubr.f32.gmra.mrb[0].mxu0 %v1147
    %v1221 = vpop.f32.mrb[0].mxu0
    %v1222 = vadd.f32 %v110, %v1221
    %v1223 = vpop.f32.mrb[0].mxu0
    %1224 = vmatprep.mubr.f32.mxu0 0.0
    %1225 = vmatmul.mubr.f32.gmra.mrb[0].mxu0 %v1149
    %v1226 = vpop.f32.mrb[0].mxu0
    %v1227 = vadd.f32 %v111, %v1226
    %v1228 = vpop.f32.mrb[0].mxu0
    %1229 = vdwg.mxu0
    %v1230 = vsel %vm243, %v1222, -inf
    %1231 = vmax.xlane.f32.xlu0 %v1230
    %v1232 = vpop.xlane.xlu0 %1231
    %v1233 = vsel %vm243, %v1227, -inf
    %1234 = vmax.xlane.f32.xlu0 %v1233
    %v1235 = vpop.xlane.xlu0 %1234
    %v1236 = vsub.f32 %v1222, %v1232
    %v1237 = vsub.f32 %v1227, %v1235
    %v1238 = vmul.f32 %v1236, 1.442695
    %v1239 = vpow.pop %v1238
    %v1240 = vmul.f32 %v1237, 1.442695
    %v1241 = vpow.pop %v1240
    %v1242 = vsel %vm243, %v1239, 0.0
    %1243 = vadd.xlane.f32.xlu0 %v1242
    %v1244 = vpop.xlane.xlu0 %1243
    %v1245 = vsel %vm243, %v1241, 0.0
    %1246 = vadd.xlane.f32.xlu0 %v1245
    %v1247 = vpop.xlane.xlu0 %1246
    %v1248 = vrcp.pop %v1244
    %v1249 = vrcp.pop %v1247
    %v1250 = vmul.f32 %v1239, %v1248
    %v1251 = vmul.f32 %v1241, %v1249
    %1252 = vrot.lane.b32.xlu0 %v935, 80
    %v1253 = vpop.permute.xlu0 %1252
    %1254 = vrot.lane.b32.xlu0 %v940, 80
    %v1255 = vpop.permute.xlu0 %1254
    %v1259 = vsel %vm243, %v1250, 0
    %v1262 = vsel %vm243, %v1251, 0
    %1264 = vmatprep.subr.mxu0 0.0
    %1265 = vmatpush1.msra.mxu0 %v1253
    %1266 = vmatprep.subr.mxu0 0.0
    %1267 = vmatpush1.msra.mxu0 %v1255
    %1268 = vmatprep.subr.mxu0 0.0
    %1269 = vmatpush1.msra.mxu0 0.0
    %1270 = vmatprep.subr.mxu0 0.0
    %1271 = vmatpush1.msra.mxu0 0.0
    %1272 = vmatprep.subr.mxu0 0.0
    %1273 = vmatpush1.msra.mxu0 0.0
    %1274 = vmatprep.subr.mxu0 0.0
    %1275 = vmatpush1.msra.mxu0 0.0
    %1276 = vmatprep.subr.mxu0 0.0
    %1277 = vmatpush1.msra.mxu0 0.0
    %1278 = vmatprep.subr.mxu0 0.0
    %1279 = vmatpush1.msra.mxu0 0.0
    %1280 = vmatprep.subr.mxu0 0.0
    %1281 = vmatpush1.msra.mxu0 0.0
    %1282 = vmatprep.subr.mxu0 0.0
    %1283 = vmatpush1.msra.mxu0 0.0
    %1284 = vmatprep.subr.mxu0 0.0
    %1285 = vmatpush1.msra.mxu0 0.0
    %1286 = vmatprep.subr.mxu0 0.0
    %1287 = vmatpush1.msra.mxu0 0.0
    %1288 = vmatprep.subr.mxu0 0.0
    %1289 = vmatpush1.msra.mxu0 0.0
    %1290 = vmatprep.subr.mxu0 0.0
    %1291 = vmatpush1.msra.mxu0 0.0
    %1292 = vmatprep.subr.mxu0 0.0
    %1293 = vmatpush1.msra.mxu0 0.0
    %1294 = vmatprep.subr.mxu0 0.0
    %1295 = vmatpush1.msra.mxu0 0.0
    %1296 = vmatprep.subr.mxu0 0.0
    %1297 = vmatpush1.msra.mxu0 0.0
    %1298 = vmatprep.subr.mxu0 0.0
    %1299 = vmatpush1.msra.mxu0 0.0
    %1300 = vmatprep.subr.mxu0 0.0
    %1301 = vmatpush1.msra.mxu0 0.0
    %1302 = vmatprep.subr.mxu0 0.0
    %1303 = vmatpush1.msra.mxu0 0.0
    %1304 = vmatprep.subr.mxu0 0.0
    %1305 = vmatpush1.msra.mxu0 0.0
    %1306 = vmatprep.subr.mxu0 0.0
    %1307 = vmatpush1.msra.mxu0 0.0
    %1308 = vmatprep.subr.mxu0 0.0
    %1309 = vmatpush1.msra.mxu0 0.0
    %1310 = vmatprep.subr.mxu0 0.0
    %1311 = vmatpush1.msra.mxu0 0.0
    %1312 = vmatprep.subr.mxu0 0.0
    %1313 = vmatpush1.msra.mxu0 0.0
    %1314 = vmatprep.subr.mxu0 0.0
    %1315 = vmatpush1.msra.mxu0 0.0
    %1316 = vmatprep.subr.mxu0 0.0
    %1317 = vmatpush1.msra.mxu0 0.0
    %1318 = vmatprep.subr.mxu0 0.0
    %1319 = vmatpush1.msra.mxu0 0.0
    %1320 = vmatprep.subr.mxu0 0.0
    %1321 = vmatpush1.msra.mxu0 0.0
    %1322 = vmatprep.subr.mxu0 0.0
    %1323 = vmatpush1.msra.mxu0 0.0
    %1324 = vmatprep.subr.mxu0 0.0
    %1325 = vmatpush1.msra.mxu0 0.0
    %1326 = vmatprep.subr.mxu0 0.0
    %1327 = vmatpush1.msra.mxu0 0.0
    %1328 = vmatprep.mubr.f32.mxu0 0.0
    %1329 = vmatmul.mubr.f32.gmra.mrb[0].mxu0 %v1259
    %v1330 = vpop.f32.mrb[0].mxu0
    %v1331 = vadd.f32 0.0, %v1330
    %v1332 = vpop.f32.mrb[0].mxu0
    %1333 = vmatprep.mubr.f32.mxu0 0.0
    %1334 = vmatmul.mubr.f32.gmra.mrb[0].mxu0 %v1262
    %v1335 = vpop.f32.mrb[0].mxu0
    %v1336 = vadd.f32 0.0, %v1335
    %v1337 = vpop.f32.mrb[0].mxu0
    %1338 = vdwg.mxu0
    %1341 = vrot.lane.b32.xlu0 %v1331, 16
    %v1342 = vpop.permute.xlu0 %1341
    %1343 = vrot.lane.b32.xlu0 %v1336, 16
    %v1344 = vpop.permute.xlu0 %1343
    %v1347 = vsel %vm243, %v1131, %v1342
    %v1348 = vsel %vm243, %v1136, %v1344
    %v1350 = vsel %vm112, %v1347, 0
    %v1353 = vsel %vm112, %v1348, 0
    %1355 = vmatprep.subr.mxu0 0.0
    %1356 = vmatpush1.msra.mxu0 %v86
    %1357 = vmatprep.subr.mxu0 0.0
    %1358 = vmatpush1.msra.mxu0 %v87
    %1359 = vmatprep.subr.mxu0 0.0
    %1360 = vmatpush1.msra.mxu0 %v88
    %1361 = vmatprep.subr.mxu0 0.0
    %1362 = vmatpush1.msra.mxu0 %v89
    %1363 = vmatprep.subr.mxu0 0.0
    %1364 = vmatpush1.msra.mxu0 0.0
    %1365 = vmatprep.subr.mxu0 0.0
    %1366 = vmatpush1.msra.mxu0 0.0
    %1367 = vmatprep.subr.mxu0 0.0
    %1368 = vmatpush1.msra.mxu0 0.0
    %1369 = vmatprep.subr.mxu0 0.0
    %1370 = vmatpush1.msra.mxu0 0.0
    %1371 = vmatprep.subr.mxu0 0.0
    %1372 = vmatpush1.msra.mxu0 0.0
    %1373 = vmatprep.subr.mxu0 0.0
    %1374 = vmatpush1.msra.mxu0 0.0
    %1375 = vmatprep.subr.mxu0 0.0
    %1376 = vmatpush1.msra.mxu0 0.0
    %1377 = vmatprep.subr.mxu0 0.0
    %1378 = vmatpush1.msra.mxu0 0.0
    %1379 = vmatprep.subr.mxu0 0.0
    %1380 = vmatpush1.msra.mxu0 0.0
    %1381 = vmatprep.subr.mxu0 0.0
    %1382 = vmatpush1.msra.mxu0 0.0
    %1383 = vmatprep.subr.mxu0 0.0
    %1384 = vmatpush1.msra.mxu0 0.0
    %1385 = vmatprep.subr.mxu0 0.0
    %1386 = vmatpush1.msra.mxu0 0.0
    %1387 = vmatprep.subr.mxu0 0.0
    %1388 = vmatpush1.msra.mxu0 0.0
    %1389 = vmatprep.subr.mxu0 0.0
    %1390 = vmatpush1.msra.mxu0 0.0
    %1391 = vmatprep.subr.mxu0 0.0
    %1392 = vmatpush1.msra.mxu0 0.0
    %1393 = vmatprep.subr.mxu0 0.0
    %1394 = vmatpush1.msra.mxu0 0.0
    %1395 = vmatprep.subr.mxu0 0.0
    %1396 = vmatpush1.msra.mxu0 0.0
    %1397 = vmatprep.subr.mxu0 0.0
    %1398 = vmatpush1.msra.mxu0 0.0
    %1399 = vmatprep.subr.mxu0 0.0
    %1400 = vmatpush1.msra.mxu0 0.0
    %1401 = vmatprep.subr.mxu0 0.0
    %1402 = vmatpush1.msra.mxu0 0.0
    %1403 = vmatprep.subr.mxu0 0.0
    %1404 = vmatpush1.msra.mxu0 0.0
    %1405 = vmatprep.subr.mxu0 0.0
    %1406 = vmatpush1.msra.mxu0 0.0
    %1407 = vmatprep.subr.mxu0 0.0
    %1408 = vmatpush1.msra.mxu0 0.0
    %1409 = vmatprep.subr.mxu0 0.0
    %1410 = vmatpush1.msra.mxu0 0.0
    %1411 = vmatprep.subr.mxu0 0.0
    %1412 = vmatpush1.msra.mxu0 0.0
    %1413 = vmatprep.subr.mxu0 0.0
    %1414 = vmatpush1.msra.mxu0 0.0
    %1415 = vmatprep.subr.mxu0 0.0
    %1416 = vmatpush1.msra.mxu0 0.0
    %1417 = vmatprep.subr.mxu0 0.0
    %1418 = vmatpush1.msra.mxu0 0.0
    %1419 = vmatprep.mubr.f32.mxu0 0.0
    %1420 = vmatmul.mubr.f32.gmra.mrb[0].mxu0 %v1350
    %v1421 = vpop.f32.mrb[0].mxu0
    %v1422 = vadd.f32 0.0, %v1421
    %v1423 = vpop.f32.mrb[0].mxu0
    %1424 = vmatprep.mubr.f32.mxu0 0.0
    %1425 = vmatmul.mubr.f32.gmra.mrb[0].mxu0 %v1353
    %v1426 = vpop.f32.mrb[0].mxu0
    %v1427 = vadd.f32 0.0, %v1426
    %v1428 = vpop.f32.mrb[0].mxu0
    %1429 = vdwg.mxu0
    %v1430 = vadd.f32 %v733, %v1422
    %v1431 = vadd.f32 %v734, %v1427
    %v1432 = vlaneseq
    %v1433 = vshrl.u32 %v1432, 7
    %v1434 = vsub.s32 0, %v1433
    %v1435 = vrot.slane %v67, %v1434
    %v1436 = vadd.f32 %v1430, %v1435
    %v1437 = vadd.f32 %v1431, %v1435
    %v1438 = vsel %vm112, %v1436, 0.0
    %1439 = vadd.xlane.f32.xlu0 %v1438
    %v1440 = vpop.xlane.xlu0 %1439
    %v1441 = vsel %vm112, %v1437, 0.0
    %1442 = vadd.xlane.f32.xlu0 %v1441
    %v1443 = vpop.xlane.xlu0 %1442
    %v1444 = vmul.f32 %v1440, %v119
    %v1445 = vmul.f32 %v1443, %v119
    %v1446 = vsub.f32 %v1436, %v1444
    %v1447 = vsub.f32 %v1437, %v1445
    %v1448 = vmul.f32 %v1446, %v1446
    %v1449 = vmul.f32 %v1447, %v1447
    %v1450 = vsel %vm112, %v1448, 0.0
    %1451 = vadd.xlane.f32.xlu0 %v1450
    %v1452 = vpop.xlane.xlu0 %1451
    %v1453 = vsel %vm112, %v1449, 0.0
    %1454 = vadd.xlane.f32.xlu0 %v1453
    %v1455 = vpop.xlane.xlu0 %1454
    %v1456 = vmul.f32 %v1452, %v119
    %v1457 = vmul.f32 %v1455, %v119
    %v1458 = vadd.f32 %v1456, 1e-05
    %v1459 = vadd.f32 %v1457, 1e-05
    %v1460 = vrsqrt.pop %v1458
    %v1461 = vrsqrt.pop %v1459
    %v1462 = vmul.f32 %v1446, %v1460
    %v1463 = vmul.f32 %v1447, %v1461
    %v1464 = vlaneseq
    %v1465 = vshrl.u32 %v1464, 7
    %v1466 = vsub.s32 0, %v1465
    %v1467 = vrot.slane %v62, %v1466
    %v1468 = vmul.f32 %v1462, %v1467
    %v1469 = vmul.f32 %v1463, %v1467
    %v1470 = vlaneseq
    %v1471 = vshrl.u32 %v1470, 7
    %v1472 = vsub.s32 0, %v1471
    %v1473 = vrot.slane %v63, %v1472
    %v1474 = vadd.f32 %v1468, %v1473
    %v1475 = vadd.f32 %v1469, %v1473
    %v1476 = vlaneseq
    %v1477 = vshrl.u32 %v1476, 7
    %v1478 = vsub.s32 0, %v1477
    %v1479 = vrot.slane %v68, %v1478
    %v1481 = vsel %vm112, %v1474, 0
    %v1484 = vsel %vm112, %v1475, 0
    %1486 = vmatprep.subr.mxu0 0.0
    %1487 = vmatpush1.msra.mxu0 %v90
    %1488 = vmatprep.subr.mxu0 0.0
    %1489 = vmatpush1.msra.mxu0 %v91
    %1490 = vmatprep.subr.mxu0 0.0
    %1491 = vmatpush1.msra.mxu0 %v92
    %1492 = vmatprep.subr.mxu0 0.0
    %1493 = vmatpush1.msra.mxu0 %v93
    %1494 = vmatprep.subr.mxu0 0.0
    %1495 = vmatpush1.msra.mxu0 0.0
    %1496 = vmatprep.subr.mxu0 0.0
    %1497 = vmatpush1.msra.mxu0 0.0
    %1498 = vmatprep.subr.mxu0 0.0
    %1499 = vmatpush1.msra.mxu0 0.0
    %1500 = vmatprep.subr.mxu0 0.0
    %1501 = vmatpush1.msra.mxu0 0.0
    %1502 = vmatprep.subr.mxu0 0.0
    %1503 = vmatpush1.msra.mxu0 0.0
    %1504 = vmatprep.subr.mxu0 0.0
    %1505 = vmatpush1.msra.mxu0 0.0
    %1506 = vmatprep.subr.mxu0 0.0
    %1507 = vmatpush1.msra.mxu0 0.0
    %1508 = vmatprep.subr.mxu0 0.0
    %1509 = vmatpush1.msra.mxu0 0.0
    %1510 = vmatprep.subr.mxu0 0.0
    %1511 = vmatpush1.msra.mxu0 0.0
    %1512 = vmatprep.subr.mxu0 0.0
    %1513 = vmatpush1.msra.mxu0 0.0
    %1514 = vmatprep.subr.mxu0 0.0
    %1515 = vmatpush1.msra.mxu0 0.0
    %1516 = vmatprep.subr.mxu0 0.0
    %1517 = vmatpush1.msra.mxu0 0.0
    %1518 = vmatprep.subr.mxu0 0.0
    %1519 = vmatpush1.msra.mxu0 0.0
    %1520 = vmatprep.subr.mxu0 0.0
    %1521 = vmatpush1.msra.mxu0 0.0
    %1522 = vmatprep.subr.mxu0 0.0
    %1523 = vmatpush1.msra.mxu0 0.0
    %1524 = vmatprep.subr.mxu0 0.0
    %1525 = vmatpush1.msra.mxu0 0.0
    %1526 = vmatprep.subr.mxu0 0.0
    %1527 = vmatpush1.msra.mxu0 0.0
    %1528 = vmatprep.subr.mxu0 0.0
    %1529 = vmatpush1.msra.mxu0 0.0
    %1530 = vmatprep.subr.mxu0 0.0
    %1531 = vmatpush1.msra.mxu0 0.0
    %1532 = vmatprep.subr.mxu0 0.0
    %1533 = vmatpush1.msra.mxu0 0.0
    %1534 = vmatprep.subr.mxu0 0.0
    %1535 = vmatpush1.msra.mxu0 0.0
    %1536 = vmatprep.subr.mxu0 0.0
    %1537 = vmatpush1.msra.mxu0 0.0
    %1538 = vmatprep.subr.mxu0 0.0
    %1539 = vmatpush1.msra.mxu0 0.0
    %1540 = vmatprep.subr.mxu0 0.0
    %1541 = vmatpush1.msra.mxu0 0.0
    %1542 = vmatprep.subr.mxu0 0.0
    %1543 = vmatpush1.msra.mxu0 0.0
    %1544 = vmatprep.subr.mxu0 0.0
    %1545 = vmatpush1.msra.mxu0 0.0
    %1546 = vmatprep.subr.mxu0 0.0
    %1547 = vmatpush1.msra.mxu0 0.0
    %1548 = vmatprep.subr.mxu0 0.0
    %1549 = vmatpush1.msra.mxu0 0.0
    %1550 = vmatprep.mubr.f32.mxu0 0.0
    %1551 = vmatmul.mubr.f32.gmra.mrb[0].mxu0 %v1481
    %v1552 = vpop.f32.mrb[0].mxu0
    %v1553 = vadd.f32 %v1479, %v1552
    %v1554 = vpop.f32.mrb[0].mxu0
    %1555 = vmatprep.mubr.f32.mxu0 0.0
    %1556 = vmatmul.mubr.f32.gmra.mrb[0].mxu0 %v1484
    %v1557 = vpop.f32.mrb[0].mxu0
    %v1558 = vadd.f32 %v1479, %v1557
    %v1559 = vpop.f32.mrb[0].mxu0
    %1560 = vdwg.mxu0
    %v1561 = vmax.f32 %v1553, 0.0
    %v1562 = vmax.f32 %v1558, 0.0
    %1563 = vmatprep.subr.mxu0 0.0
    %1564 = vmatpush1.msra.mxu0 %v94
    %1565 = vmatprep.subr.mxu0 0.0
    %1566 = vmatpush1.msra.mxu0 %v95
    %1567 = vmatprep.subr.mxu0 0.0
    %1568 = vmatpush1.msra.mxu0 %v96
    %1569 = vmatprep.subr.mxu0 0.0
    %1570 = vmatpush1.msra.mxu0 %v97
    %1571 = vmatprep.subr.mxu0 0.0
    %1572 = vmatpush1.msra.mxu0 %v98
    %1573 = vmatprep.subr.mxu0 0.0
    %1574 = vmatpush1.msra.mxu0 %v99
    %1575 = vmatprep.subr.mxu0 0.0
    %1576 = vmatpush1.msra.mxu0 %v100
    %1577 = vmatprep.subr.mxu0 0.0
    %1578 = vmatpush1.msra.mxu0 %v101
    %1579 = vmatprep.subr.mxu0 0.0
    %1580 = vmatpush1.msra.mxu0 %v102
    %1581 = vmatprep.subr.mxu0 0.0
    %1582 = vmatpush1.msra.mxu0 %v103
    %1583 = vmatprep.subr.mxu0 0.0
    %1584 = vmatpush1.msra.mxu0 %v104
    %1585 = vmatprep.subr.mxu0 0.0
    %1586 = vmatpush1.msra.mxu0 %v105
    %1587 = vmatprep.subr.mxu0 0.0
    %1588 = vmatpush1.msra.mxu0 %v106
    %1589 = vmatprep.subr.mxu0 0.0
    %1590 = vmatpush1.msra.mxu0 %v107
    %1591 = vmatprep.subr.mxu0 0.0
    %1592 = vmatpush1.msra.mxu0 %v108
    %1593 = vmatprep.subr.mxu0 0.0
    %1594 = vmatpush1.msra.mxu0 %v109
    %1595 = vmatprep.subr.mxu0 0.0
    %1596 = vmatpush1.msra.mxu0 0.0
    %1597 = vmatprep.subr.mxu0 0.0
    %1598 = vmatpush1.msra.mxu0 0.0
    %1599 = vmatprep.subr.mxu0 0.0
    %1600 = vmatpush1.msra.mxu0 0.0
    %1601 = vmatprep.subr.mxu0 0.0
    %1602 = vmatpush1.msra.mxu0 0.0
    %1603 = vmatprep.subr.mxu0 0.0
    %1604 = vmatpush1.msra.mxu0 0.0
    %1605 = vmatprep.subr.mxu0 0.0
    %1606 = vmatpush1.msra.mxu0 0.0
    %1607 = vmatprep.subr.mxu0 0.0
    %1608 = vmatpush1.msra.mxu0 0.0
    %1609 = vmatprep.subr.mxu0 0.0
    %1610 = vmatpush1.msra.mxu0 0.0
    %1611 = vmatprep.subr.mxu0 0.0
    %1612 = vmatpush1.msra.mxu0 0.0
    %1613 = vmatprep.subr.mxu0 0.0
    %1614 = vmatpush1.msra.mxu0 0.0
    %1615 = vmatprep.subr.mxu0 0.0
    %1616 = vmatpush1.msra.mxu0 0.0
    %1617 = vmatprep.subr.mxu0 0.0
    %1618 = vmatpush1.msra.mxu0 0.0
    %1619 = vmatprep.subr.mxu0 0.0
    %1620 = vmatpush1.msra.mxu0 0.0
    %1621 = vmatprep.subr.mxu0 0.0
    %1622 = vmatpush1.msra.mxu0 0.0
    %1623 = vmatprep.subr.mxu0 0.0
    %1624 = vmatpush1.msra.mxu0 0.0
    %1625 = vmatprep.subr.mxu0 0.0
    %1626 = vmatpush1.msra.mxu0 0.0
    %1627 = vmatprep.mubr.f32.mxu0 0.0
    %1628 = vmatmul.mubr.f32.gmra.mrb[0].mxu0 %v1561
    %v1629 = vpop.f32.mrb[0].mxu0
    %v1630 = vadd.f32 0.0, %v1629
    %v1631 = vpop.f32.mrb[0].mxu0
    %1632 = vmatprep.mubr.f32.mxu0 0.0
    %1633 = vmatmul.mubr.f32.gmra.mrb[0].mxu0 %v1562
    %v1634 = vpop.f32.mrb[0].mxu0
    %v1635 = vadd.f32 0.0, %v1634
    %v1636 = vpop.f32.mrb[0].mxu0
    %1637 = vdwg.mxu0
    %v1638 = vadd.f32 %v1436, %v1630
    %v1639 = vadd.f32 %v1437, %v1635
    %v1640 = vlaneseq
    %v1641 = vshrl.u32 %v1640, 7
    %v1642 = vsub.s32 0, %v1641
    %v1643 = vrot.slane %v69, %v1642
    %v1644 = vadd.f32 %v1638, %v1643
    %v1645 = vadd.f32 %v1639, %v1643
    %1646 = vst.msk [vmem:[#allocation8] sm:$0xff] %vm112, %v1644
    %1647 = vst.msk [vmem:[#allocation8 + $0x8] sm:$0xff] %vm112, %v1645
    // Predicated region
    $region26: #{tpu_custom_call.1} parent=1 // pred_check
      _
    $region27: #{tpu_custom_call.1} parent=1 // pred_check_branch
      %1649 = sbr.rel (0) target = $region29
    $region28: #{tpu_custom_call.1} parent=1 // pred_region
      %s1651 = ssub.s32 256, 256
      %1652 = vsyncadd [#allocation4], %s1651
      %s1653 = sshll.u32 [#allocation8], 4
      %s1654 = int_to_ptr.vmem [resolvable:$true] %s1653
      %1659 = dma.vmem_to_hbm [thread:$0]  %s1654, 256, %s3, [#allocation4], 128, 128, 8
    $region29: #{tpu_custom_call.1} parent=1 // pred_fallthru
      _
    // Predicated region
    $region30: #{tpu_custom_call.1} parent=1 // pred_check
      _
    $region31: #{tpu_custom_call.1} parent=1 // pred_check_branch
      %1661 = sbr.rel (0) target = $region33
    $region32: #{tpu_custom_call.1} parent=1 // pred_region
      %1662 = dma.done [#allocation4], 256
    $region33: #{tpu_custom_call.1} parent=1 // pred_fallthru
      _
    %1663 = vsyncpa [#allocation3], 1
    %1664 = vsyncpa [#allocation6], 1
    %1665 = vsyncpa [#allocation4], 1

</llo_original>
